<compile_context>
chip_gen: v6e
topology: v6e:2x2x1
jax: 0.10.0
libtpu: 0.0.40
codegen_flags: <defaults>
</compile_context>

<pallas_src>
import jax
import jax.numpy as jnp
from jax import lax
from jax.experimental import pallas as pl
from jax.experimental.pallas import tpu as pltpu


def _bigru_direction_kernel(x_ref,      # (T, Bp, Dp)   time-major input (shared)
                            wih_ref,    # (Dp, 3H)      this direction's Wih^T
                            bi_ref,     # (1, 3H)       folded input biases
                            whh_ref,    # (H, 3H)       this direction's Whh^T
                            bhn_ref,    # (1, H)        b_hh n-gate
                            h_out_ref,  # (Bp, H)       final hidden state
                            gi_scr):    # (T*Bp, 3H)    VMEM: precomputed input gates
    T, B, D = x_ref.shape
    H = bhn_ref.shape[1]
    is_bwd = pl.program_id(0) == 1

    # ---- phase 1: one MXU GEMM for this direction's input projections over
    #      ALL timesteps (hoisted out of the recurrence).  r/z gates have
    #      b_ih + b_hh pre-folded; the n gate keeps only b_ih here.
    x2d = x_ref[...].reshape(T * B, D)
    gi_scr[...] = (jnp.dot(x2d, wih_ref[...], preferred_element_type=jnp.float32)
                   + bi_ref[...])

    # ---- phase 2: serial recurrence, hidden state carried in vregs.
    whh = whh_ref[...]                                   # (H, 3H), no zero padding
    bhn = jnp.broadcast_to(bhn_ref[...], (B, H))         # hoisted broadcast

    def step(t, h):
        # forward consumes timestep t, backward consumes timestep T-1-t.
        row = jnp.where(is_bwd, (T - 1 - t) * B, t * B)
        row = pl.multiple_of(row, 8)                     # Bp is a multiple of 8
        gi = gi_scr[pl.ds(row, B), :]                    # (B, 3H), whole tiles
        gh = jnp.dot(h, whh, preferred_element_type=jnp.float32)   # (B, 3H)

        # PyTorch GRU equations
        r = jax.nn.sigmoid(gi[:, :H] + gh[:, :H])
        z = jax.nn.sigmoid(gi[:, H:2 * H] + gh[:, H:2 * H])
        n = jnp.tanh(gi[:, 2 * H:] + r * (gh[:, 2 * H:] + bhn))
        return (1.0 - z) * n + z * h

    h0 = jnp.zeros((B, H), jnp.float32)
    # Bounded unroll: enough to hide one step's MXU/EUP latency, no more.
    h = lax.fori_loop(0, T, step, h0, unroll=min(8, T))
    h_out_ref[...] = h


def _vmem_limit_bytes():
    """Scoped-VMEM budget: well above the conservative defaults, clamped to
    3/4 of physical VMEM (v5e/v6e: 128 MiB, v7x: 64 MiB per TC)."""
    try:
        cap = pltpu.get_tpu_info().vmem_capacity_bytes
        return int(min(100 * 1024 * 1024, (cap * 3) // 4))
    except Exception:
        return 64 * 1024 * 1024


def _prepare_kernel_params(p, d_pad):
    """One-time fold/transpose of PyTorch-layout GRU+Linear params into the
    per-direction layouts the kernel consumes."""
    H = p["w_hh_f"].shape[1]
    C = p["w_fc"].shape[0]

    def fold_bias(b_ih, b_hh):
        # r/z gates: both biases commute -> fold into the input GEMM.
        # n gate: b_hh stays inside the reset product, only b_ih is folded.
        return jnp.concatenate([b_ih[:2 * H] + b_hh[:2 * H], b_ih[2 * H:]])

    def wih_t(w_ih):                      # (3H, D) -> (Dp, 3H), K-dim zero-padded
        w = w_ih.T
        if d_pad:
            w = jnp.pad(w, ((0, d_pad), (0, 0)))
        return w

    return dict(
        wih=jnp.stack([wih_t(p["w_ih_f"]), wih_t(p["w_ih_b"])]),          # (2, Dp, 3H)
        bi=jnp.stack([fold_bias(p["b_ih_f"], p["b_hh_f"]).reshape(1, 3 * H),
                      fold_bias(p["b_ih_b"], p["b_hh_b"]).reshape(1, 3 * H)]),  # (2,1,3H)
        whh=jnp.stack([p["w_hh_f"].T, p["w_hh_b"].T]),                    # (2, H, 3H)
        bhn=jnp.stack([p["b_hh_f"][2 * H:].reshape(1, H),
                       p["b_hh_b"][2 * H:].reshape(1, H)]),               # (2, 1, H)
        wfc_f=p["w_fc"][:, :H].T,                                         # (H, C)
        wfc_b=p["w_fc"][:, H:].T,                                         # (H, C)
        bfc=p["b_fc"].reshape(1, C),
    )


@jax.jit
def winning_party_classifier(x_btd, torch_params):
    """x_btd: (B, T, D) float32 (PyTorch batch_first). Returns (B, num_classes)."""
    B, T, D = x_btd.shape
    H = torch_params["w_hh_f"].shape[1]
    C = torch_params["w_fc"].shape[0]

    # Pad batch to a sublane multiple (8) and D to a lane multiple (128).
    Bp = ((B + 7) // 8) * 8
    Dp = ((D + 127) // 128) * 128
    kp = _prepare_kernel_params(torch_params, Dp - D)
    if Bp != B or Dp != D:
        x_btd = jnp.pad(x_btd, ((0, Bp - B), (0, 0), (0, Dp - D)))

    # Time-major so each timestep's gate rows are contiguous whole tiles.
    # TODO(synk): fold this transpose into a T-gridded pipelined variant.
    x_tbd = jnp.transpose(x_btd, (1, 0, 2))

    grid_spec = pltpu.PrefetchScalarGridSpec(
        num_scalar_prefetch=0,
        grid=(2,),                                     # grid axis = GRU direction
        in_specs=[
            pl.BlockSpec((T, Bp, Dp), lambda d: (0, 0, 0)),        # x (shared, resident)
            pl.BlockSpec((None, Dp, 3 * H), lambda d: (d, 0, 0)),  # Wih^T per direction
            pl.BlockSpec((None, 1, 3 * H), lambda d: (d, 0, 0)),   # folded input bias
            pl.BlockSpec((None, H, 3 * H), lambda d: (d, 0, 0)),   # Whh^T per direction
            pl.BlockSpec((None, 1, H), lambda d: (d, 0, 0)),       # b_hh n-gate
        ],
        out_specs=pl.BlockSpec((None, Bp, H), lambda d: (d, 0, 0)),
        scratch_shapes=[pltpu.VMEM((T * Bp, 3 * H), jnp.float32)],
    )

    h_dirs = pl.pallas_call(
        _bigru_direction_kernel,
        out_shape=jax.ShapeDtypeStruct((2, Bp, H), jnp.float32),
        grid_spec=grid_spec,
        compiler_params=pltpu.CompilerParams(
            dimension_semantics=("parallel",),         # two TCs on v7x, serial elsewhere
            vmem_limit_bytes=_vmem_limit_bytes(),
        ),
    )(x_tbd, kp["wih"], kp["bi"], kp["whh"], kp["bhn"])

    # Final Linear (2H -> C): split into two matmuls so no lane-axis concat is
    # materialized; it is tiny (C=2) and lane-sparse, so it stays in XLA.
    hf = h_dirs[0, :B]
    hb = h_dirs[1, :B]
    return hf @ kp["wfc_f"] + hb @ kp["wfc_b"] + kp["bfc"]


def _ref_forward(x_btd, p):
    """Pure-JAX reference mirroring PyTorch nn.GRU(bidirectional) + nn.Linear."""
    B, T, D = x_btd.shape
    H = p["w_hh_f"].shape[1]

    def cell(x_t, h, w_ih, w_hh, b_ih, b_hh):
        gi = x_t @ w_ih.T + b_ih
        gh = h @ w_hh.T + b_hh
        r = jax.nn.sigmoid(gi[:, :H] + gh[:, :H])
        z = jax.nn.sigmoid(gi[:, H:2 * H] + gh[:, H:2 * H])
        n = jnp.tanh(gi[:, 2 * H:] + r * gh[:, 2 * H:])
        return (1.0 - z) * n + z * h

    hf = jnp.zeros((B, H), jnp.float32)
    hb = jnp.zeros((B, H), jnp.float32)
    for t in range(T):
        hf = cell(x_btd[:, t], hf, p["w_ih_f"], p["w_hh_f"], p["b_ih_f"], p["b_hh_f"])
        hb = cell(x_btd[:, T - 1 - t], hb, p["w_ih_b"], p["w_hh_b"], p["b_ih_b"], p["b_hh_b"])
    doc = jnp.concatenate([hf, hb], axis=1)
    return doc @ p["w_fc"].T + p["b_fc"]


def init_params(key, input_dim, hidden_dim, num_classes):
    """Deterministic synthetic parameters in PyTorch nn.GRU / nn.Linear layout."""
    ks = jax.random.split(key, 10)
    s = 1.0 / jnp.sqrt(jnp.float32(hidden_dim))

    def u(k, shape):
        return jax.random.uniform(k, shape, jnp.float32, -s, s)

    H, D, C = hidden_dim, input_dim, num_classes
    return {
        "w_ih_f": u(ks[0], (3 * H, D)), "w_hh_f": u(ks[1], (3 * H, H)),
        "b_ih_f": u(ks[2], (3 * H,)),   "b_hh_f": u(ks[3], (3 * H,)),
        "w_ih_b": u(ks[4], (3 * H, D)), "w_hh_b": u(ks[5], (3 * H, H)),
        "b_ih_b": u(ks[6], (3 * H,)),   "b_hh_b": u(ks[7], (3 * H,)),
        "w_fc":   u(ks[8], (C, 2 * H)), "b_fc":   u(ks[9], (C,)),
    }


if __name__ == "__main__":
    # batch, max_sentences, sentence-embedding dim (lane-full), hidden (spec's 128), classes
    B, T, D, H, C = 8, 8, 128, 128, 2
    key = jax.random.PRNGKey(0)
    k_param, k_x = jax.random.split(key)

    params = init_params(k_param, D, H, C)
    x = jax.random.normal(k_x, (B, T, D), jnp.float32)   # (batch, seq, input_dim)

    logits = winning_party_classifier(x, params)
    jax.block_until_ready(logits)

    ref = _ref_forward(x, params)
    assert logits.shape == (B, C)
    assert jnp.allclose(logits, ref, rtol=1e-3, atol=1e-3), "mismatch vs reference"

    print("KERNEL_OK")
</pallas_src>

<mosaic_0001>
module attributes {stable_mosaic.version = 11 : i64} {
  func.func @_bigru_direction_kernel(%arg0: i32, %arg1: memref<8x8x128xf32, #tpu.memory_space<vmem>>, %arg2: memref<1x128x384xf32, #tpu.memory_space<vmem>>, %arg3: memref<1x1x384xf32, #tpu.memory_space<vmem>>, %arg4: memref<1x128x384xf32, #tpu.memory_space<vmem>>, %arg5: memref<1x1x128xf32, #tpu.memory_space<vmem>>, %arg6: memref<1x8x128xf32, #tpu.memory_space<vmem>>, %arg7: memref<64x384xf32, #tpu.memory_space<vmem>>) attributes {dimension_semantics = [#tpu.dimension_semantics<parallel>], iteration_bounds = array<i64: 2>, scalar_prefetch = 0 : i64, scratch_operands = 1 : i64, tpu.core_type = #tpu.core_type<tc>, window_params = [{pipeline_mode = #tpu.pipeline_mode<synchronous>, transform_indices = @transform_0, window_bounds = array<i64: 8, 8, 128>}, {transform_indices = @transform_1, window_bounds = array<i64: 1, 128, 384>}, {transform_indices = @transform_2, window_bounds = array<i64: 1, 1, 384>}, {transform_indices = @transform_3, window_bounds = array<i64: 1, 128, 384>}, {transform_indices = @transform_4, window_bounds = array<i64: 1, 1, 128>}, {transform_indices = @transform_5, window_bounds = array<i64: 1, 8, 128>}]} {
    %c1_i32 = arith.constant 1 : i32
    %0 = arith.cmpi eq, %arg0, %c1_i32 : i32
    %c0 = arith.constant 0 : index
    %c0_0 = arith.constant 0 : index
    %c0_1 = arith.constant 0 : index
    %1 = vector.load %arg1[%c0, %c0_0, %c0_1] : memref<8x8x128xf32, #tpu.memory_space<vmem>>, vector<8x8x128xf32>
    %2 = vector.shape_cast %1 : vector<8x8x128xf32> to vector<64x128xf32>
    %c0_2 = arith.constant 0 : index
    %c0_3 = arith.constant 0 : index
    %c0_4 = arith.constant 0 : index
    %3 = vector.load %arg2[%c0_2, %c0_3, %c0_4] : memref<1x128x384xf32, #tpu.memory_space<vmem>>, vector<1x128x384xf32>
    %4 = vector.shape_cast %3 : vector<1x128x384xf32> to vector<128x384xf32>
    %cst = arith.constant dense<0.000000e+00> : vector<64x384xf32>
    %5 = tpu.matmul %2, %4, %cst {dimension_numbers = #tpu.dot_dimension_numbers<[1], [0], [0], [1], [0, 0, 1, 1], [], []>} : vector<64x128xf32>, vector<128x384xf32>, vector<64x384xf32> -> vector<64x384xf32>
    %c0_5 = arith.constant 0 : index
    %c0_6 = arith.constant 0 : index
    %c0_7 = arith.constant 0 : index
    %6 = vector.load %arg3[%c0_5, %c0_6, %c0_7] : memref<1x1x384xf32, #tpu.memory_space<vmem>>, vector<1x1x384xf32>
    %7 = vector.shape_cast %6 : vector<1x1x384xf32> to vector<1x384xf32>
    %8 = vector.broadcast %7 : vector<1x384xf32> to vector<64x384xf32>
    %9 = arith.addf %5, %8 : vector<64x384xf32>
    %c0_8 = arith.constant 0 : index
    %c0_9 = arith.constant 0 : index
    %10 = vector.load %arg7[%c0_8, %c0_9] : memref<64x384xf32, #tpu.memory_space<vmem>>, vector<64x384xf32>
    tpu.vector_store %arg7[%c0_8, %c0_9], %9 {strides = array<i32>} : memref<64x384xf32, #tpu.memory_space<vmem>>, vector<64x384xf32>,
    %c0_10 = arith.constant 0 : index
    %c0_11 = arith.constant 0 : index
    %c0_12 = arith.constant 0 : index
    %11 = vector.load %arg4[%c0_10, %c0_11, %c0_12] : memref<1x128x384xf32, #tpu.memory_space<vmem>>, vector<1x128x384xf32>
    %12 = vector.shape_cast %11 : vector<1x128x384xf32> to vector<128x384xf32>
    %c0_13 = arith.constant 0 : index
    %c0_14 = arith.constant 0 : index
    %c0_15 = arith.constant 0 : index
    %13 = vector.load %arg5[%c0_13, %c0_14, %c0_15] : memref<1x1x128xf32, #tpu.memory_space<vmem>>, vector<1x1x128xf32>
    %14 = vector.shape_cast %13 : vector<1x1x128xf32> to vector<1x128xf32>
    %15 = vector.shape_cast %14 : vector<1x128xf32> to vector<1x128xf32>
    %16 = vector.broadcast %15 : vector<1x128xf32> to vector<8x128xf32>
    %cst_16 = arith.constant 0.000000e+00 : f32
    %17 = vector.broadcast %cst_16 : f32 to vector<8x128xf32>
    %c0_i32 = arith.constant 0 : i32
    %c7_i32 = arith.constant 7 : i32
    %18 = arith.subi %c7_i32, %c0_i32 : i32
    %c8_i32 = arith.constant 8 : i32
    %19 = arith.muli %18, %c8_i32 : i32
    %c8_i32_17 = arith.constant 8 : i32
    %20 = arith.muli %c0_i32, %c8_i32_17 : i32
    %21 = arith.select %0, %19, %20 : i32
    %22 = tpu.assume_multiple %21, 8 : i32
    %23 = arith.index_cast %22 : i32 to index
    %c0_18 = arith.constant 0 : index
    %24 = vector.load %arg7[%23, %c0_18] : memref<64x384xf32, #tpu.memory_space<vmem>>, vector<8x384xf32>
    %cst_19 = arith.constant dense<0.000000e+00> : vector<8x384xf32>
    %25 = tpu.matmul %17, %12, %cst_19 {dimension_numbers = #tpu.dot_dimension_numbers<[1], [0], [0], [1], [0, 0, 1, 1], [], []>} : vector<8x128xf32>, vector<128x384xf32>, vector<8x384xf32> -> vector<8x384xf32>
    %26 = vector.extract_strided_slice %24 {offsets = [0, 0], sizes = [8, 128], strides = [1, 1]} : vector<8x384xf32> to vector<8x128xf32>
    %27 = vector.extract_strided_slice %25 {offsets = [0, 0], sizes = [8, 128], strides = [1, 1]} : vector<8x384xf32> to vector<8x128xf32>
    %28 = arith.addf %26, %27 : vector<8x128xf32>
    %29 = arith.negf %28 : vector<8x128xf32>
    %30 = math.exp %29 : vector<8x128xf32>
    %cst_20 = arith.constant 1.000000e+00 : f32
    %31 = vector.broadcast %cst_20 : f32 to vector<8x128xf32>
    %32 = arith.addf %31, %30 : vector<8x128xf32>
    %33 = arith.divf %31, %32 : vector<8x128xf32>
    %34 = vector.extract_strided_slice %24 {offsets = [0, 128], sizes = [8, 128], strides = [1, 1]} : vector<8x384xf32> to vector<8x128xf32>
    %35 = vector.extract_strided_slice %25 {offsets = [0, 128], sizes = [8, 128], strides = [1, 1]} : vector<8x384xf32> to vector<8x128xf32>
    %36 = arith.addf %34, %35 : vector<8x128xf32>
    %37 = arith.negf %36 : vector<8x128xf32>
    %38 = math.exp %37 : vector<8x128xf32>
    %cst_21 = arith.constant 1.000000e+00 : f32
    %39 = vector.broadcast %cst_21 : f32 to vector<8x128xf32>
    %40 = arith.addf %39, %38 : vector<8x128xf32>
    %41 = arith.divf %39, %40 : vector<8x128xf32>
    %42 = vector.extract_strided_slice %24 {offsets = [0, 256], sizes = [8, 128], strides = [1, 1]} : vector<8x384xf32> to vector<8x128xf32>
    %43 = vector.extract_strided_slice %25 {offsets = [0, 256], sizes = [8, 128], strides = [1, 1]} : vector<8x384xf32> to vector<8x128xf32>
    %44 = arith.addf %43, %16 : vector<8x128xf32>
    %45 = arith.mulf %33, %44 : vector<8x128xf32>
    %46 = arith.addf %42, %45 : vector<8x128xf32>
    %47 = math.tanh %46 : vector<8x128xf32>
    %cst_22 = arith.constant 1.000000e+00 : f32
    %48 = vector.broadcast %cst_22 : f32 to vector<8x128xf32>
    %49 = arith.subf %48, %41 : vector<8x128xf32>
    %50 = arith.mulf %49, %47 : vector<8x128xf32>
    %51 = arith.mulf %41, %17 : vector<8x128xf32>
    %52 = arith.addf %50, %51 : vector<8x128xf32>
    %c1_i32_23 = arith.constant 1 : i32
    %c7_i32_24 = arith.constant 7 : i32
    %53 = arith.subi %c7_i32_24, %c1_i32_23 : i32
    %c8_i32_25 = arith.constant 8 : i32
    %54 = arith.muli %53, %c8_i32_25 : i32
    %c8_i32_26 = arith.constant 8 : i32
    %55 = arith.muli %c1_i32_23, %c8_i32_26 : i32
    %56 = arith.select %0, %54, %55 : i32
    %57 = tpu.assume_multiple %56, 8 : i32
    %58 = arith.index_cast %57 : i32 to index
    %c0_27 = arith.constant 0 : index
    %59 = vector.load %arg7[%58, %c0_27] : memref<64x384xf32, #tpu.memory_space<vmem>>, vector<8x384xf32>
    %cst_28 = arith.constant dense<0.000000e+00> : vector<8x384xf32>
    %60 = tpu.matmul %52, %12, %cst_28 {dimension_numbers = #tpu.dot_dimension_numbers<[1], [0], [0], [1], [0, 0, 1, 1], [], []>} : vector<8x128xf32>, vector<128x384xf32>, vector<8x384xf32> -> vector<8x384xf32>
    %61 = vector.extract_strided_slice %59 {offsets = [0, 0], sizes = [8, 128], strides = [1, 1]} : vector<8x384xf32> to vector<8x128xf32>
    %62 = vector.extract_strided_slice %60 {offsets = [0, 0], sizes = [8, 128], strides = [1, 1]} : vector<8x384xf32> to vector<8x128xf32>
    %63 = arith.addf %61, %62 : vector<8x128xf32>
    %64 = arith.negf %63 : vector<8x128xf32>
    %65 = math.exp %64 : vector<8x128xf32>
    %cst_29 = arith.constant 1.000000e+00 : f32
    %66 = vector.broadcast %cst_29 : f32 to vector<8x128xf32>
    %67 = arith.addf %66, %65 : vector<8x128xf32>
    %68 = arith.divf %66, %67 : vector<8x128xf32>
    %69 = vector.extract_strided_slice %59 {offsets = [0, 128], sizes = [8, 128], strides = [1, 1]} : vector<8x384xf32> to vector<8x128xf32>
    %70 = vector.extract_strided_slice %60 {offsets = [0, 128], sizes = [8, 128], strides = [1, 1]} : vector<8x384xf32> to vector<8x128xf32>
    %71 = arith.addf %69, %70 : vector<8x128xf32>
    %72 = arith.negf %71 : vector<8x128xf32>
    %73 = math.exp %72 : vector<8x128xf32>
    %cst_30 = arith.constant 1.000000e+00 : f32
    %74 = vector.broadcast %cst_30 : f32 to vector<8x128xf32>
    %75 = arith.addf %74, %73 : vector<8x128xf32>
    %76 = arith.divf %74, %75 : vector<8x128xf32>
    %77 = vector.extract_strided_slice %59 {offsets = [0, 256], sizes = [8, 128], strides = [1, 1]} : vector<8x384xf32> to vector<8x128xf32>
    %78 = vector.extract_strided_slice %60 {offsets = [0, 256], sizes = [8, 128], strides = [1, 1]} : vector<8x384xf32> to vector<8x128xf32>
    %79 = arith.addf %78, %16 : vector<8x128xf32>
    %80 = arith.mulf %68, %79 : vector<8x128xf32>
    %81 = arith.addf %77, %80 : vector<8x128xf32>
    %82 = math.tanh %81 : vector<8x128xf32>
    %cst_31 = arith.constant 1.000000e+00 : f32
    %83 = vector.broadcast %cst_31 : f32 to vector<8x128xf32>
    %84 = arith.subf %83, %76 : vector<8x128xf32>
    %85 = arith.mulf %84, %82 : vector<8x128xf32>
    %86 = arith.mulf %76, %52 : vector<8x128xf32>
    %87 = arith.addf %85, %86 : vector<8x128xf32>
    %c2_i32 = arith.constant 2 : i32
    %c7_i32_32 = arith.constant 7 : i32
    %88 = arith.subi %c7_i32_32, %c2_i32 : i32
    %c8_i32_33 = arith.constant 8 : i32
    %89 = arith.muli %88, %c8_i32_33 : i32
    %c8_i32_34 = arith.constant 8 : i32
    %90 = arith.muli %c2_i32, %c8_i32_34 : i32
    %91 = arith.select %0, %89, %90 : i32
    %92 = tpu.assume_multiple %91, 8 : i32
    %93 = arith.index_cast %92 : i32 to index
    %c0_35 = arith.constant 0 : index
    %94 = vector.load %arg7[%93, %c0_35] : memref<64x384xf32, #tpu.memory_space<vmem>>, vector<8x384xf32>
    %cst_36 = arith.constant dense<0.000000e+00> : vector<8x384xf32>
    %95 = tpu.matmul %87, %12, %cst_36 {dimension_numbers = #tpu.dot_dimension_numbers<[1], [0], [0], [1], [0, 0, 1, 1], [], []>} : vector<8x128xf32>, vector<128x384xf32>, vector<8x384xf32> -> vector<8x384xf32>
    %96 = vector.extract_strided_slice %94 {offsets = [0, 0], sizes = [8, 128], strides = [1, 1]} : vector<8x384xf32> to vector<8x128xf32>
    %97 = vector.extract_strided_slice %95 {offsets = [0, 0], sizes = [8, 128], strides = [1, 1]} : vector<8x384xf32> to vector<8x128xf32>
    %98 = arith.addf %96, %97 : vector<8x128xf32>
    %99 = arith.negf %98 : vector<8x128xf32>
    %100 = math.exp %99 : vector<8x128xf32>
    %cst_37 = arith.constant 1.000000e+00 : f32
    %101 = vector.broadcast %cst_37 : f32 to vector<8x128xf32>
    %102 = arith.addf %101, %100 : vector<8x128xf32>
    %103 = arith.divf %101, %102 : vector<8x128xf32>
    %104 = vector.extract_strided_slice %94 {offsets = [0, 128], sizes = [8, 128], strides = [1, 1]} : vector<8x384xf32> to vector<8x128xf32>
    %105 = vector.extract_strided_slice %95 {offsets = [0, 128], sizes = [8, 128], strides = [1, 1]} : vector<8x384xf32> to vector<8x128xf32>
    %106 = arith.addf %104, %105 : vector<8x128xf32>
    %107 = arith.negf %106 : vector<8x128xf32>
    %108 = math.exp %107 : vector<8x128xf32>
    %cst_38 = arith.constant 1.000000e+00 : f32
    %109 = vector.broadcast %cst_38 : f32 to vector<8x128xf32>
    %110 = arith.addf %109, %108 : vector<8x128xf32>
    %111 = arith.divf %109, %110 : vector<8x128xf32>
    %112 = vector.extract_strided_slice %94 {offsets = [0, 256], sizes = [8, 128], strides = [1, 1]} : vector<8x384xf32> to vector<8x128xf32>
    %113 = vector.extract_strided_slice %95 {offsets = [0, 256], sizes = [8, 128], strides = [1, 1]} : vector<8x384xf32> to vector<8x128xf32>
    %114 = arith.addf %113, %16 : vector<8x128xf32>
    %115 = arith.mulf %103, %114 : vector<8x128xf32>
    %116 = arith.addf %112, %115 : vector<8x128xf32>
    %117 = math.tanh %116 : vector<8x128xf32>
    %cst_39 = arith.constant 1.000000e+00 : f32
    %118 = vector.broadcast %cst_39 : f32 to vector<8x128xf32>
    %119 = arith.subf %118, %111 : vector<8x128xf32>
    %120 = arith.mulf %119, %117 : vector<8x128xf32>
    %121 = arith.mulf %111, %87 : vector<8x128xf32>
    %122 = arith.addf %120, %121 : vector<8x128xf32>
    %c3_i32 = arith.constant 3 : i32
    %c7_i32_40 = arith.constant 7 : i32
    %123 = arith.subi %c7_i32_40, %c3_i32 : i32
    %c8_i32_41 = arith.constant 8 : i32
    %124 = arith.muli %123, %c8_i32_41 : i32
    %c8_i32_42 = arith.constant 8 : i32
    %125 = arith.muli %c3_i32, %c8_i32_42 : i32
    %126 = arith.select %0, %124, %125 : i32
    %127 = tpu.assume_multiple %126, 8 : i32
    %128 = arith.index_cast %127 : i32 to index
    %c0_43 = arith.constant 0 : index
    %129 = vector.load %arg7[%128, %c0_43] : memref<64x384xf32, #tpu.memory_space<vmem>>, vector<8x384xf32>
    %cst_44 = arith.constant dense<0.000000e+00> : vector<8x384xf32>
    %130 = tpu.matmul %122, %12, %cst_44 {dimension_numbers = #tpu.dot_dimension_numbers<[1], [0], [0], [1], [0, 0, 1, 1], [], []>} : vector<8x128xf32>, vector<128x384xf32>, vector<8x384xf32> -> vector<8x384xf32>
    %131 = vector.extract_strided_slice %129 {offsets = [0, 0], sizes = [8, 128], strides = [1, 1]} : vector<8x384xf32> to vector<8x128xf32>
    %132 = vector.extract_strided_slice %130 {offsets = [0, 0], sizes = [8, 128], strides = [1, 1]} : vector<8x384xf32> to vector<8x128xf32>
    %133 = arith.addf %131, %132 : vector<8x128xf32>
    %134 = arith.negf %133 : vector<8x128xf32>
    %135 = math.exp %134 : vector<8x128xf32>
    %cst_45 = arith.constant 1.000000e+00 : f32
    %136 = vector.broadcast %cst_45 : f32 to vector<8x128xf32>
    %137 = arith.addf %136, %135 : vector<8x128xf32>
    %138 = arith.divf %136, %137 : vector<8x128xf32>
    %139 = vector.extract_strided_slice %129 {offsets = [0, 128], sizes = [8, 128], strides = [1, 1]} : vector<8x384xf32> to vector<8x128xf32>
    %140 = vector.extract_strided_slice %130 {offsets = [0, 128], sizes = [8, 128], strides = [1, 1]} : vector<8x384xf32> to vector<8x128xf32>
    %141 = arith.addf %139, %140 : vector<8x128xf32>
    %142 = arith.negf %141 : vector<8x128xf32>
    %143 = math.exp %142 : vector<8x128xf32>
    %cst_46 = arith.constant 1.000000e+00 : f32
    %144 = vector.broadcast %cst_46 : f32 to vector<8x128xf32>
    %145 = arith.addf %144, %143 : vector<8x128xf32>
    %146 = arith.divf %144, %145 : vector<8x128xf32>
    %147 = vector.extract_strided_slice %129 {offsets = [0, 256], sizes = [8, 128], strides = [1, 1]} : vector<8x384xf32> to vector<8x128xf32>
    %148 = vector.extract_strided_slice %130 {offsets = [0, 256], sizes = [8, 128], strides = [1, 1]} : vector<8x384xf32> to vector<8x128xf32>
    %149 = arith.addf %148, %16 : vector<8x128xf32>
    %150 = arith.mulf %138, %149 : vector<8x128xf32>
    %151 = arith.addf %147, %150 : vector<8x128xf32>
    %152 = math.tanh %151 : vector<8x128xf32>
    %cst_47 = arith.constant 1.000000e+00 : f32
    %153 = vector.broadcast %cst_47 : f32 to vector<8x128xf32>
    %154 = arith.subf %153, %146 : vector<8x128xf32>
    %155 = arith.mulf %154, %152 : vector<8x128xf32>
    %156 = arith.mulf %146, %122 : vector<8x128xf32>
    %157 = arith.addf %155, %156 : vector<8x128xf32>
    %c4_i32 = arith.constant 4 : i32
    %c7_i32_48 = arith.constant 7 : i32
    %158 = arith.subi %c7_i32_48, %c4_i32 : i32
    %c8_i32_49 = arith.constant 8 : i32
    %159 = arith.muli %158, %c8_i32_49 : i32
    %c8_i32_50 = arith.constant 8 : i32
    %160 = arith.muli %c4_i32, %c8_i32_50 : i32
    %161 = arith.select %0, %159, %160 : i32
    %162 = tpu.assume_multiple %161, 8 : i32
    %163 = arith.index_cast %162 : i32 to index
    %c0_51 = arith.constant 0 : index
    %164 = vector.load %arg7[%163, %c0_51] : memref<64x384xf32, #tpu.memory_space<vmem>>, vector<8x384xf32>
    %cst_52 = arith.constant dense<0.000000e+00> : vector<8x384xf32>
    %165 = tpu.matmul %157, %12, %cst_52 {dimension_numbers = #tpu.dot_dimension_numbers<[1], [0], [0], [1], [0, 0, 1, 1], [], []>} : vector<8x128xf32>, vector<128x384xf32>, vector<8x384xf32> -> vector<8x384xf32>
    %166 = vector.extract_strided_slice %164 {offsets = [0, 0], sizes = [8, 128], strides = [1, 1]} : vector<8x384xf32> to vector<8x128xf32>
    %167 = vector.extract_strided_slice %165 {offsets = [0, 0], sizes = [8, 128], strides = [1, 1]} : vector<8x384xf32> to vector<8x128xf32>
    %168 = arith.addf %166, %167 : vector<8x128xf32>
    %169 = arith.negf %168 : vector<8x128xf32>
    %170 = math.exp %169 : vector<8x128xf32>
    %cst_53 = arith.constant 1.000000e+00 : f32
    %171 = vector.broadcast %cst_53 : f32 to vector<8x128xf32>
    %172 = arith.addf %171, %170 : vector<8x128xf32>
    %173 = arith.divf %171, %172 : vector<8x128xf32>
    %174 = vector.extract_strided_slice %164 {offsets = [0, 128], sizes = [8, 128], strides = [1, 1]} : vector<8x384xf32> to vector<8x128xf32>
    %175 = vector.extract_strided_slice %165 {offsets = [0, 128], sizes = [8, 128], strides = [1, 1]} : vector<8x384xf32> to vector<8x128xf32>
    %176 = arith.addf %174, %175 : vector<8x128xf32>
    %177 = arith.negf %176 : vector<8x128xf32>
    %178 = math.exp %177 : vector<8x128xf32>
    %cst_54 = arith.constant 1.000000e+00 : f32
    %179 = vector.broadcast %cst_54 : f32 to vector<8x128xf32>
    %180 = arith.addf %179, %178 : vector<8x128xf32>
    %181 = arith.divf %179, %180 : vector<8x128xf32>
    %182 = vector.extract_strided_slice %164 {offsets = [0, 256], sizes = [8, 128], strides = [1, 1]} : vector<8x384xf32> to vector<8x128xf32>
    %183 = vector.extract_strided_slice %165 {offsets = [0, 256], sizes = [8, 128], strides = [1, 1]} : vector<8x384xf32> to vector<8x128xf32>
    %184 = arith.addf %183, %16 : vector<8x128xf32>
    %185 = arith.mulf %173, %184 : vector<8x128xf32>
    %186 = arith.addf %182, %185 : vector<8x128xf32>
    %187 = math.tanh %186 : vector<8x128xf32>
    %cst_55 = arith.constant 1.000000e+00 : f32
    %188 = vector.broadcast %cst_55 : f32 to vector<8x128xf32>
    %189 = arith.subf %188, %181 : vector<8x128xf32>
    %190 = arith.mulf %189, %187 : vector<8x128xf32>
    %191 = arith.mulf %181, %157 : vector<8x128xf32>
    %192 = arith.addf %190, %191 : vector<8x128xf32>
    %c5_i32 = arith.constant 5 : i32
    %c7_i32_56 = arith.constant 7 : i32
    %193 = arith.subi %c7_i32_56, %c5_i32 : i32
    %c8_i32_57 = arith.constant 8 : i32
    %194 = arith.muli %193, %c8_i32_57 : i32
    %c8_i32_58 = arith.constant 8 : i32
    %195 = arith.muli %c5_i32, %c8_i32_58 : i32
    %196 = arith.select %0, %194, %195 : i32
    %197 = tpu.assume_multiple %196, 8 : i32
    %198 = arith.index_cast %197 : i32 to index
    %c0_59 = arith.constant 0 : index
    %199 = vector.load %arg7[%198, %c0_59] : memref<64x384xf32, #tpu.memory_space<vmem>>, vector<8x384xf32>
    %cst_60 = arith.constant dense<0.000000e+00> : vector<8x384xf32>
    %200 = tpu.matmul %192, %12, %cst_60 {dimension_numbers = #tpu.dot_dimension_numbers<[1], [0], [0], [1], [0, 0, 1, 1], [], []>} : vector<8x128xf32>, vector<128x384xf32>, vector<8x384xf32> -> vector<8x384xf32>
    %201 = vector.extract_strided_slice %199 {offsets = [0, 0], sizes = [8, 128], strides = [1, 1]} : vector<8x384xf32> to vector<8x128xf32>
    %202 = vector.extract_strided_slice %200 {offsets = [0, 0], sizes = [8, 128], strides = [1, 1]} : vector<8x384xf32> to vector<8x128xf32>
    %203 = arith.addf %201, %202 : vector<8x128xf32>
    %204 = arith.negf %203 : vector<8x128xf32>
    %205 = math.exp %204 : vector<8x128xf32>
    %cst_61 = arith.constant 1.000000e+00 : f32
    %206 = vector.broadcast %cst_61 : f32 to vector<8x128xf32>
    %207 = arith.addf %206, %205 : vector<8x128xf32>
    %208 = arith.divf %206, %207 : vector<8x128xf32>
    %209 = vector.extract_strided_slice %199 {offsets = [0, 128], sizes = [8, 128], strides = [1, 1]} : vector<8x384xf32> to vector<8x128xf32>
    %210 = vector.extract_strided_slice %200 {offsets = [0, 128], sizes = [8, 128], strides = [1, 1]} : vector<8x384xf32> to vector<8x128xf32>
    %211 = arith.addf %209, %210 : vector<8x128xf32>
    %212 = arith.negf %211 : vector<8x128xf32>
    %213 = math.exp %212 : vector<8x128xf32>
    %cst_62 = arith.constant 1.000000e+00 : f32
    %214 = vector.broadcast %cst_62 : f32 to vector<8x128xf32>
    %215 = arith.addf %214, %213 : vector<8x128xf32>
    %216 = arith.divf %214, %215 : vector<8x128xf32>
    %217 = vector.extract_strided_slice %199 {offsets = [0, 256], sizes = [8, 128], strides = [1, 1]} : vector<8x384xf32> to vector<8x128xf32>
    %218 = vector.extract_strided_slice %200 {offsets = [0, 256], sizes = [8, 128], strides = [1, 1]} : vector<8x384xf32> to vector<8x128xf32>
    %219 = arith.addf %218, %16 : vector<8x128xf32>
    %220 = arith.mulf %208, %219 : vector<8x128xf32>
    %221 = arith.addf %217, %220 : vector<8x128xf32>
    %222 = math.tanh %221 : vector<8x128xf32>
    %cst_63 = arith.constant 1.000000e+00 : f32
    %223 = vector.broadcast %cst_63 : f32 to vector<8x128xf32>
    %224 = arith.subf %223, %216 : vector<8x128xf32>
    %225 = arith.mulf %224, %222 : vector<8x128xf32>
    %226 = arith.mulf %216, %192 : vector<8x128xf32>
    %227 = arith.addf %225, %226 : vector<8x128xf32>
    %c6_i32 = arith.constant 6 : i32
    %c7_i32_64 = arith.constant 7 : i32
    %228 = arith.subi %c7_i32_64, %c6_i32 : i32
    %c8_i32_65 = arith.constant 8 : i32
    %229 = arith.muli %228, %c8_i32_65 : i32
    %c8_i32_66 = arith.constant 8 : i32
    %230 = arith.muli %c6_i32, %c8_i32_66 : i32
    %231 = arith.select %0, %229, %230 : i32
    %232 = tpu.assume_multiple %231, 8 : i32
    %233 = arith.index_cast %232 : i32 to index
    %c0_67 = arith.constant 0 : index
    %234 = vector.load %arg7[%233, %c0_67] : memref<64x384xf32, #tpu.memory_space<vmem>>, vector<8x384xf32>
    %cst_68 = arith.constant dense<0.000000e+00> : vector<8x384xf32>
    %235 = tpu.matmul %227, %12, %cst_68 {dimension_numbers = #tpu.dot_dimension_numbers<[1], [0], [0], [1], [0, 0, 1, 1], [], []>} : vector<8x128xf32>, vector<128x384xf32>, vector<8x384xf32> -> vector<8x384xf32>
    %236 = vector.extract_strided_slice %234 {offsets = [0, 0], sizes = [8, 128], strides = [1, 1]} : vector<8x384xf32> to vector<8x128xf32>
    %237 = vector.extract_strided_slice %235 {offsets = [0, 0], sizes = [8, 128], strides = [1, 1]} : vector<8x384xf32> to vector<8x128xf32>
    %238 = arith.addf %236, %237 : vector<8x128xf32>
    %239 = arith.negf %238 : vector<8x128xf32>
    %240 = math.exp %239 : vector<8x128xf32>
    %cst_69 = arith.constant 1.000000e+00 : f32
    %241 = vector.broadcast %cst_69 : f32 to vector<8x128xf32>
    %242 = arith.addf %241, %240 : vector<8x128xf32>
    %243 = arith.divf %241, %242 : vector<8x128xf32>
    %244 = vector.extract_strided_slice %234 {offsets = [0, 128], sizes = [8, 128], strides = [1, 1]} : vector<8x384xf32> to vector<8x128xf32>
    %245 = vector.extract_strided_slice %235 {offsets = [0, 128], sizes = [8, 128], strides = [1, 1]} : vector<8x384xf32> to vector<8x128xf32>
    %246 = arith.addf %244, %245 : vector<8x128xf32>
    %247 = arith.negf %246 : vector<8x128xf32>
    %248 = math.exp %247 : vector<8x128xf32>
    %cst_70 = arith.constant 1.000000e+00 : f32
    %249 = vector.broadcast %cst_70 : f32 to vector<8x128xf32>
    %250 = arith.addf %249, %248 : vector<8x128xf32>
    %251 = arith.divf %249, %250 : vector<8x128xf32>
    %252 = vector.extract_strided_slice %234 {offsets = [0, 256], sizes = [8, 128], strides = [1, 1]} : vector<8x384xf32> to vector<8x128xf32>
    %253 = vector.extract_strided_slice %235 {offsets = [0, 256], sizes = [8, 128], strides = [1, 1]} : vector<8x384xf32> to vector<8x128xf32>
    %254 = arith.addf %253, %16 : vector<8x128xf32>
    %255 = arith.mulf %243, %254 : vector<8x128xf32>
    %256 = arith.addf %252, %255 : vector<8x128xf32>
    %257 = math.tanh %256 : vector<8x128xf32>
    %cst_71 = arith.constant 1.000000e+00 : f32
    %258 = vector.broadcast %cst_71 : f32 to vector<8x128xf32>
    %259 = arith.subf %258, %251 : vector<8x128xf32>
    %260 = arith.mulf %259, %257 : vector<8x128xf32>
    %261 = arith.mulf %251, %227 : vector<8x128xf32>
    %262 = arith.addf %260, %261 : vector<8x128xf32>
    %c7_i32_72 = arith.constant 7 : i32
    %c7_i32_73 = arith.constant 7 : i32
    %263 = arith.subi %c7_i32_73, %c7_i32_72 : i32
    %c8_i32_74 = arith.constant 8 : i32
    %264 = arith.muli %263, %c8_i32_74 : i32
    %c8_i32_75 = arith.constant 8 : i32
    %265 = arith.muli %c7_i32_72, %c8_i32_75 : i32
    %266 = arith.select %0, %264, %265 : i32
    %267 = tpu.assume_multiple %266, 8 : i32
    %268 = arith.index_cast %267 : i32 to index
    %c0_76 = arith.constant 0 : index
    %269 = vector.load %arg7[%268, %c0_76] : memref<64x384xf32, #tpu.memory_space<vmem>>, vector<8x384xf32>
    %cst_77 = arith.constant dense<0.000000e+00> : vector<8x384xf32>
    %270 = tpu.matmul %262, %12, %cst_77 {dimension_numbers = #tpu.dot_dimension_numbers<[1], [0], [0], [1], [0, 0, 1, 1], [], []>} : vector<8x128xf32>, vector<128x384xf32>, vector<8x384xf32> -> vector<8x384xf32>
    %271 = vector.extract_strided_slice %269 {offsets = [0, 0], sizes = [8, 128], strides = [1, 1]} : vector<8x384xf32> to vector<8x128xf32>
    %272 = vector.extract_strided_slice %270 {offsets = [0, 0], sizes = [8, 128], strides = [1, 1]} : vector<8x384xf32> to vector<8x128xf32>
    %273 = arith.addf %271, %272 : vector<8x128xf32>
    %274 = arith.negf %273 : vector<8x128xf32>
    %275 = math.exp %274 : vector<8x128xf32>
    %cst_78 = arith.constant 1.000000e+00 : f32
    %276 = vector.broadcast %cst_78 : f32 to vector<8x128xf32>
    %277 = arith.addf %276, %275 : vector<8x128xf32>
    %278 = arith.divf %276, %277 : vector<8x128xf32>
    %279 = vector.extract_strided_slice %269 {offsets = [0, 128], sizes = [8, 128], strides = [1, 1]} : vector<8x384xf32> to vector<8x128xf32>
    %280 = vector.extract_strided_slice %270 {offsets = [0, 128], sizes = [8, 128], strides = [1, 1]} : vector<8x384xf32> to vector<8x128xf32>
    %281 = arith.addf %279, %280 : vector<8x128xf32>
    %282 = arith.negf %281 : vector<8x128xf32>
    %283 = math.exp %282 : vector<8x128xf32>
    %cst_79 = arith.constant 1.000000e+00 : f32
    %284 = vector.broadcast %cst_79 : f32 to vector<8x128xf32>
    %285 = arith.addf %284, %283 : vector<8x128xf32>
    %286 = arith.divf %284, %285 : vector<8x128xf32>
    %287 = vector.extract_strided_slice %269 {offsets = [0, 256], sizes = [8, 128], strides = [1, 1]} : vector<8x384xf32> to vector<8x128xf32>
    %288 = vector.extract_strided_slice %270 {offsets = [0, 256], sizes = [8, 128], strides = [1, 1]} : vector<8x384xf32> to vector<8x128xf32>
    %289 = arith.addf %288, %16 : vector<8x128xf32>
    %290 = arith.mulf %278, %289 : vector<8x128xf32>
    %291 = arith.addf %287, %290 : vector<8x128xf32>
    %292 = math.tanh %291 : vector<8x128xf32>
    %cst_80 = arith.constant 1.000000e+00 : f32
    %293 = vector.broadcast %cst_80 : f32 to vector<8x128xf32>
    %294 = arith.subf %293, %286 : vector<8x128xf32>
    %295 = arith.mulf %294, %292 : vector<8x128xf32>
    %296 = arith.mulf %286, %262 : vector<8x128xf32>
    %297 = arith.addf %295, %296 : vector<8x128xf32>
    %c8_i32_81 = arith.constant 8 : i32
    %c0_82 = arith.constant 0 : index
    %c0_83 = arith.constant 0 : index
    %c0_84 = arith.constant 0 : index
    %298 = vector.load %arg6[%c0_82, %c0_83, %c0_84] : memref<1x8x128xf32, #tpu.memory_space<vmem>>, vector<1x8x128xf32>
    %299 = vector.shape_cast %298 : vector<1x8x128xf32> to vector<8x128xf32>
    %300 = vector.shape_cast %297 : vector<8x128xf32> to vector<1x8x128xf32>
    tpu.vector_store %arg6[%c0_82, %c0_83, %c0_84], %300 {strides = array<i32>} : memref<1x8x128xf32, #tpu.memory_space<vmem>>, vector<1x8x128xf32>,
    return
  }
  func.func @transform_0(%arg0: i32) -> (i32, i32, i32) {
    %c0_i32 = arith.constant 0 : i32
    %c0_i32_0 = arith.constant 0 : i32
    %c0_i32_1 = arith.constant 0 : i32
    %c0_i32_2 = arith.constant 0 : i32
    return %c0_i32, %c0_i32_0, %c0_i32_1 : i32, i32, i32
  }
  func.func @transform_1(%arg0: i32) -> (i32, i32, i32) {
    %c0_i32 = arith.constant 0 : i32
    %c0_i32_0 = arith.constant 0 : i32
    %c0_i32_1 = arith.constant 0 : i32
    return %arg0, %c0_i32, %c0_i32_0 : i32, i32, i32
  }
  func.func @transform_2(%arg0: i32) -> (i32, i32, i32) {
    %c0_i32 = arith.constant 0 : i32
    %c0_i32_0 = arith.constant 0 : i32
    %c0_i32_1 = arith.constant 0 : i32
    return %arg0, %c0_i32, %c0_i32_0 : i32, i32, i32
  }
  func.func @transform_3(%arg0: i32) -> (i32, i32, i32) {
    %c0_i32 = arith.constant 0 : i32
    %c0_i32_0 = arith.constant 0 : i32
    %c0_i32_1 = arith.constant 0 : i32
    return %arg0, %c0_i32, %c0_i32_0 : i32, i32, i32
  }
  func.func @transform_4(%arg0: i32) -> (i32, i32, i32) {
    %c0_i32 = arith.constant 0 : i32
    %c0_i32_0 = arith.constant 0 : i32
    %c0_i32_1 = arith.constant 0 : i32
    return %arg0, %c0_i32, %c0_i32_0 : i32, i32, i32
  }
  func.func @transform_5(%arg0: i32) -> (i32, i32, i32) {
    %c0_i32 = arith.constant 0 : i32
    %c0_i32_0 = arith.constant 0 : i32
    %c0_i32_1 = arith.constant 0 : i32
    return %arg0, %c0_i32, %c0_i32_0 : i32, i32, i32
  }
}

</mosaic_0001>

<llo_original>
// kernel: winning_party_classifier.1
$region0: #{winning_party_classifier.1}
  #allocation0 [shape = 'u32[]', space=smem, size = 0x4, offset = 0x4, fixed_abs, tag = 'smem constant byte address 0x4 - core index']
  #allocation1 [shape = 'u32[144,128]{1,0:T(1,128)}', space=vmem, size = 0x12000, scoped, tag = 'internal scratch']
  #allocation2 [shape = 'f32[64,384]{1,0:T(8,128)}', space=vmem, size = 0x18000, scoped, tag = 'scratch operand']
  %s0 = inlined_call_operand.vmem [shape: f32[8,8,128], index: 0, kind: input, shape index: {}]
  %s1 = inlined_call_operand.vmem [shape: f32[2,128,384], index: 1, kind: input, shape index: {}]
  %s2 = inlined_call_operand.vmem [shape: f32[2,1,384], index: 2, kind: input, shape index: {}]
  %s3 = inlined_call_operand.vmem [shape: f32[2,128,384], index: 3, kind: input, shape index: {}]
  %s4 = inlined_call_operand.vmem [shape: f32[2,1,128], index: 4, kind: input, shape index: {}]
  %s5 = inlined_call_operand.vmem [shape: f32[2,8,128], index: 5, kind: output, shape index: {}]
  %s6 = sld [smem:[#allocation0]]
  $region53: #{winning_party_classifier.1} parent=0
    _
  %s8 = ssub.s32 1, %s6
  %s9 = scalar_select 0, %s8, %s6
  loop: start=0, step=1, limit=4
  $region2: #{winning_party_classifier.1} parent=0 // loop_pre_header
    _
  $region3: #{winning_party_classifier.1} parent=0 // loop_header
    %s11 = sphi 0, %s15
    %p12 = scmp.ge.s32.totalorder %s11, 4
    %s19 = sphi 0, %s19
    %s21 = sphi 0, %s19
    %s22 = sphi 0, %s21
    %s36 = sphi 0, %s22
    %s42 = sphi 0, %s44
    %s45 = sphi 0, %s42
    %s46 = sphi 0, %s45
    %s62 = sphi 0, %s46
    %s68 = sphi 0, %s70
    %s71 = sphi 0, %s68
    %s72 = sphi 0, %s71
    %s88 = sphi 0, %s72
    %s94 = sphi 0, %s96
    %s97 = sphi 0, %s94
    %s98 = sphi 0, %s97
    %s114 = sphi 0, %s98
    %s120 = sphi 0, %s122
    %s123 = sphi 0, %s120
    %s124 = sphi 0, %s123
    %s140 = sphi 0, %s124
    %s146 = sphi 0, %s148
    %s149 = sphi 0, %s146
    %s150 = sphi 0, %s149
    %s166 = sphi 0, %s150
  $region4: #{winning_party_classifier.1} parent=0 // loop_header_branch
    %14 = sbr.rel (%p12) target = $region8
  $region5: #{winning_party_classifier.1} parent=0 // loop_body
    %s16 = ssub.s32 %s11, 1
    %s17 = ssub.s32 %s11, 2
    %s18 = sadd.s32 %s11, 1
    %s20 = sadd.s32 %s19, 1
    %p23 = scmp.eq.s32.totalorder %s11, 1
    %p24 = scmp.ne.s32.totalorder %s19, %s21
    %p25 = scmp.eq.s32.totalorder %s11, 0
    %p26 = por %p24, %p25
    %p27 = scmp.ne.s32.totalorder %s19, %s21
    %p28 = scmp.eq.s32.totalorder %s16, 1
    %p29 = por %p27, %p28
    %p30 = scmp.ne.s32.totalorder %s21, %s22
    %p31 = scmp.eq.s32.totalorder %s16, 0
    %p32 = por %p30, %p31
    %p33 = scmp.ne.s32.totalorder %s21, %s22
    %p34 = scmp.eq.s32.totalorder %s17, 1
    %p35 = por %p33, %p34
    %p37 = scmp.ne.s32.totalorder %s22, %s36
    %p38 = scmp.eq.s32.totalorder %s17, 0
    %p39 = por %p37, %p38
    %s40 = ssub.s32 %s11, %s18
    %p41 = scmp.eq.s32.totalorder %s40, 0
    %s43 = sadd.s32 %s42, 1
    %s44 = scalar_select %p41, %s42, %s43
    %p47 = pneg %p41
    %p48 = scmp.eq.s32.totalorder %s11, 1
    %p49 = por %p47, %p48
    %p50 = scmp.ne.s32.totalorder %s42, %s45
    %p51 = scmp.eq.s32.totalorder %s11, 0
    %p52 = por %p50, %p51
    %p53 = scmp.ne.s32.totalorder %s42, %s45
    %p54 = scmp.eq.s32.totalorder %s16, 1
    %p55 = por %p53, %p54
    %p56 = scmp.ne.s32.totalorder %s45, %s46
    %p57 = scmp.eq.s32.totalorder %s16, 0
    %p58 = por %p56, %p57
    %p59 = scmp.ne.s32.totalorder %s45, %s46
    %p60 = scmp.eq.s32.totalorder %s17, 1
    %p61 = por %p59, %p60
    %p63 = scmp.ne.s32.totalorder %s46, %s62
    %p64 = scmp.eq.s32.totalorder %s17, 0
    %p65 = por %p63, %p64
    %s66 = ssub.s32 %s11, %s18
    %p67 = scmp.eq.s32.totalorder %s66, 0
    %s69 = sadd.s32 %s68, 1
    %s70 = scalar_select %p67, %s68, %s69
    %p73 = pneg %p67
    %p74 = scmp.eq.s32.totalorder %s11, 1
    %p75 = por %p73, %p74
    %p76 = scmp.ne.s32.totalorder %s68, %s71
    %p77 = scmp.eq.s32.totalorder %s11, 0
    %p78 = por %p76, %p77
    %p79 = scmp.ne.s32.totalorder %s68, %s71
    %p80 = scmp.eq.s32.totalorder %s16, 1
    %p81 = por %p79, %p80
    %p82 = scmp.ne.s32.totalorder %s71, %s72
    %p83 = scmp.eq.s32.totalorder %s16, 0
    %p84 = por %p82, %p83
    %p85 = scmp.ne.s32.totalorder %s71, %s72
    %p86 = scmp.eq.s32.totalorder %s17, 1
    %p87 = por %p85, %p86
    %p89 = scmp.ne.s32.totalorder %s72, %s88
    %p90 = scmp.eq.s32.totalorder %s17, 0
    %p91 = por %p89, %p90
    %s92 = ssub.s32 %s11, %s18
    %p93 = scmp.eq.s32.totalorder %s92, 0
    %s95 = sadd.s32 %s94, 1
    %s96 = scalar_select %p93, %s94, %s95
    %p99 = pneg %p93
    %p100 = scmp.eq.s32.totalorder %s11, 1
    %p101 = por %p99, %p100
    %p102 = scmp.ne.s32.totalorder %s94, %s97
    %p103 = scmp.eq.s32.totalorder %s11, 0
    %p104 = por %p102, %p103
    %p105 = scmp.ne.s32.totalorder %s94, %s97
    %p106 = scmp.eq.s32.totalorder %s16, 1
    %p107 = por %p105, %p106
    %p108 = scmp.ne.s32.totalorder %s97, %s98
    %p109 = scmp.eq.s32.totalorder %s16, 0
    %p110 = por %p108, %p109
    %p111 = scmp.ne.s32.totalorder %s97, %s98
    %p112 = scmp.eq.s32.totalorder %s17, 1
    %p113 = por %p111, %p112
    %p115 = scmp.ne.s32.totalorder %s98, %s114
    %p116 = scmp.eq.s32.totalorder %s17, 0
    %p117 = por %p115, %p116
    %s118 = ssub.s32 %s11, %s18
    %p119 = scmp.eq.s32.totalorder %s118, 0
    %s121 = sadd.s32 %s120, 1
    %s122 = scalar_select %p119, %s120, %s121
    %p125 = pneg %p119
    %p126 = scmp.eq.s32.totalorder %s11, 1
    %p127 = por %p125, %p126
    %p128 = scmp.ne.s32.totalorder %s120, %s123
    %p129 = scmp.eq.s32.totalorder %s11, 0
    %p130 = por %p128, %p129
    %p131 = scmp.ne.s32.totalorder %s120, %s123
    %p132 = scmp.eq.s32.totalorder %s16, 1
    %p133 = por %p131, %p132
    %p134 = scmp.ne.s32.totalorder %s123, %s124
    %p135 = scmp.eq.s32.totalorder %s16, 0
    %p136 = por %p134, %p135
    %p137 = scmp.ne.s32.totalorder %s123, %s124
    %p138 = scmp.eq.s32.totalorder %s17, 1
    %p139 = por %p137, %p138
    %p141 = scmp.ne.s32.totalorder %s124, %s140
    %p142 = scmp.eq.s32.totalorder %s17, 0
    %p143 = por %p141, %p142
    %s144 = ssub.s32 %s11, %s18
    %p145 = scmp.eq.s32.totalorder %s144, 0
    %s147 = sadd.s32 %s146, 1
    %s148 = scalar_select %p145, %s146, %s147
    %p151 = pneg %p145
    %p152 = scmp.eq.s32.totalorder %s11, 1
    %p153 = por %p151, %p152
    %p154 = scmp.ne.s32.totalorder %s146, %s149
    %p155 = scmp.eq.s32.totalorder %s11, 0
    %p156 = por %p154, %p155
    %p157 = scmp.ne.s32.totalorder %s146, %s149
    %p158 = scmp.eq.s32.totalorder %s16, 1
    %p159 = por %p157, %p158
    %p160 = scmp.ne.s32.totalorder %s149, %s150
    %p161 = scmp.eq.s32.totalorder %s16, 0
    %p162 = por %p160, %p161
    %p163 = scmp.ne.s32.totalorder %s149, %s150
    %p164 = scmp.eq.s32.totalorder %s17, 1
    %p165 = por %p163, %p164
    %p167 = scmp.ne.s32.totalorder %s150, %s166
    %p168 = scmp.eq.s32.totalorder %s17, 0
    %p169 = por %p167, %p168
    %p170 = scmp.le.s32.totalorder 1, %s11
    %p171 = scmp.lt.s32.totalorder %s11, 3
    %p172 = pnand %p170, %p171
    %p173 = pneg %p172
    // Predicated region
    $region9: #{winning_party_classifier.1} parent=5 // pred_check
      _
    $region10: #{winning_party_classifier.1} parent=5 // pred_check_branch
      %175 = sbr.rel (%p172) target = $region12
    $region11: #{winning_party_classifier.1} parent=5 // pred_region
      %s176 = ssub.s32 %s11, 1
      // Predicated region
      $region13: #{winning_party_classifier.1} parent=11 // pred_check
        %p177 = pneg %p32
      $region14: #{winning_party_classifier.1} parent=11 // pred_check_branch
        %179 = sbr.rel (%p177) target = $region16
      $region15: #{winning_party_classifier.1} parent=11 // pred_region
        _
      $region16: #{winning_party_classifier.1} parent=11 // pred_fallthru
        _
    $region12: #{winning_party_classifier.1} parent=5 // pred_fallthru
      _
    %p180 = scmp.lt.s32.totalorder %s11, 2
    // Predicated region
    $region17: #{winning_party_classifier.1} parent=5 // pred_check
      %p181 = pneg %p180
    $region18: #{winning_party_classifier.1} parent=5 // pred_check_branch
      %183 = sbr.rel (%p181) target = $region20
    $region19: #{winning_party_classifier.1} parent=5 // pred_region
      // Predicated region
      $region21: #{winning_party_classifier.1} parent=19 // pred_check
        %p184 = pneg %p52
      $region22: #{winning_party_classifier.1} parent=19 // pred_check_branch
        %186 = sbr.rel (%p184) target = $region24
      $region23: #{winning_party_classifier.1} parent=19 // pred_region
        %p187 = scmp.lt.s32.totalorder %s11, 1
        %s188 = scalar_select %p187, %s11, 1
        %s189 = smul.addr %s188, 48
        %s190 = smul.addr %s189, 8
        %s191 = scalar_lea.vmem %s1, %s190
      $region24: #{winning_party_classifier.1} parent=19 // pred_fallthru
        _
      // Predicated region
      $region25: #{winning_party_classifier.1} parent=19 // pred_check
        %p192 = pneg %p78
      $region26: #{winning_party_classifier.1} parent=19 // pred_check_branch
        %194 = sbr.rel (%p192) target = $region28
      $region27: #{winning_party_classifier.1} parent=19 // pred_region
        %p195 = scmp.lt.s32.totalorder %s11, 1
        %s196 = scalar_select %p195, %s11, 1
        %s197 = smul.addr %s196, 3
        %s198 = scalar_lea.vmem %s2, %s197
      $region28: #{winning_party_classifier.1} parent=19 // pred_fallthru
        _
      // Predicated region
      $region29: #{winning_party_classifier.1} parent=19 // pred_check
        %p199 = pneg %p104
      $region30: #{winning_party_classifier.1} parent=19 // pred_check_branch
        %201 = sbr.rel (%p199) target = $region32
      $region31: #{winning_party_classifier.1} parent=19 // pred_region
        %p202 = scmp.lt.s32.totalorder %s11, 1
        %s203 = scalar_select %p202, %s11, 1
        %s204 = smul.addr %s203, 48
        %s205 = smul.addr %s204, 8
        %s206 = scalar_lea.vmem %s3, %s205
      $region32: #{winning_party_classifier.1} parent=19 // pred_fallthru
        _
      // Predicated region
      $region33: #{winning_party_classifier.1} parent=19 // pred_check
        %p207 = pneg %p130
      $region34: #{winning_party_classifier.1} parent=19 // pred_check_branch
        %209 = sbr.rel (%p207) target = $region36
      $region35: #{winning_party_classifier.1} parent=19 // pred_region
        %p210 = scmp.lt.s32.totalorder %s11, 1
        %s211 = scalar_select %p210, %s11, 1
        %s212 = scalar_lea.vmem %s4, %s211
      $region36: #{winning_party_classifier.1} parent=19 // pred_fallthru
        _
    $region20: #{winning_party_classifier.1} parent=5 // pred_fallthru
      _
    %p213 = scmp.le.s32.totalorder 1, %s11
    %p214 = scmp.lt.s32.totalorder %s11, 3
    %p215 = pnand %p213, %p214
    %p216 = pneg %p215
    // Predicated region
    $region37: #{winning_party_classifier.1} parent=5 // pred_check
      _
    $region38: #{winning_party_classifier.1} parent=5 // pred_check_branch
      %218 = sbr.rel (%p215) target = $region40
    $region39: #{winning_party_classifier.1} parent=5 // pred_region
      %s219 = ssub.s32 %s11, 1
      %p220 = pneg %p32
      %p221 = pneg %p29
      %p222 = scmp.lt.s32.totalorder %s16, 1
      %s223 = scalar_select %p222, %s16, 1
      %s224 = smul.addr %s223, 48
      %s225 = smul.addr %s224, 8
      %s226 = scalar_lea.vmem %s1, %s225
      %p227 = pneg %p58
      %p228 = pneg %p55
      %p229 = scmp.lt.s32.totalorder %s16, 1
      %s230 = scalar_select %p229, %s16, 1
      %s231 = smul.addr %s230, 3
      %s232 = scalar_lea.vmem %s2, %s231
      %p233 = pneg %p84
      %p234 = pneg %p81
      %p235 = scmp.lt.s32.totalorder %s16, 1
      %s236 = scalar_select %p235, %s16, 1
      %s237 = smul.addr %s236, 48
      %s238 = smul.addr %s237, 8
      %s239 = scalar_lea.vmem %s3, %s238
      %p240 = pneg %p110
      %p241 = pneg %p107
      %p242 = scmp.lt.s32.totalorder %s16, 1
      %s243 = scalar_select %p242, %s16, 1
      %s244 = scalar_lea.vmem %s4, %s243
      %p245 = pneg %p136
      %p246 = pneg %p133
      %p247 = pneg %p162
      %p248 = pneg %p159
      %p249 = scmp.lt.s32.totalorder %s16, 1
      %s250 = scalar_select %p249, %s16, 1
      %s251 = smul.addr %s250, 8
      %s252 = scalar_lea.vmem %s5, %s251
      %p253 = scmp.lt.s32.totalorder %s16, 1
      %s254 = scalar_select %p253, %s16, 1
      %s255 = smul.addr %s254, 48
      %s256 = smul.addr %s255, 8
      %s257 = scalar_lea.vmem %s1, %s256
      %p258 = scmp.lt.s32.totalorder %s16, 1
      %s259 = scalar_select %p258, %s16, 1
      %s260 = smul.addr %s259, 3
      %s261 = scalar_lea.vmem %s2, %s260
      %p262 = scmp.lt.s32.totalorder %s16, 1
      %s263 = scalar_select %p262, %s16, 1
      %s264 = smul.addr %s263, 48
      %s265 = smul.addr %s264, 8
      %s266 = scalar_lea.vmem %s3, %s265
      %p267 = scmp.lt.s32.totalorder %s16, 1
      %s268 = scalar_select %p267, %s16, 1
      %s269 = scalar_lea.vmem %s4, %s268
      %p270 = scmp.lt.s32.totalorder %s16, 1
      %s271 = scalar_select %p270, %s16, 1
      %s272 = smul.addr %s271, 8
      %s273 = scalar_lea.vmem %s5, %s272
      %p274 = scmp.eq.s32.totalorder %s16, 1
      %v275 = vld [vmem:[%s0] sm:$0xff]
      %v276 = vld [vmem:[%s0 + $0x8] sm:$0xff]
      %v277 = vld [vmem:[%s0 + $0x10] sm:$0xff]
      %v278 = vld [vmem:[%s0 + $0x18] sm:$0xff]
      %v279 = vld [vmem:[%s0 + $0x20] sm:$0xff]
      %v280 = vld [vmem:[%s0 + $0x28] sm:$0xff]
      %v281 = vld [vmem:[%s0 + $0x30] sm:$0xff]
      %v282 = vld [vmem:[%s0 + $0x38] sm:$0xff]
      %v283 = vld [vmem:[%s257] sm:$0xff]
      %v284 = vld [vmem:[%s257 + $0x8] sm:$0xff]
      %v285 = vld [vmem:[%s257 + $0x10] sm:$0xff]
      %v286 = vld [vmem:[%s257 + $0x18] sm:$0xff]
      %v287 = vld [vmem:[%s257 + $0x20] sm:$0xff]
      %v288 = vld [vmem:[%s257 + $0x28] sm:$0xff]
      %v289 = vld [vmem:[%s257 + $0x30] sm:$0xff]
      %v290 = vld [vmem:[%s257 + $0x38] sm:$0xff]
      %v291 = vld [vmem:[%s257 + $0x40] sm:$0xff]
      %v292 = vld [vmem:[%s257 + $0x48] sm:$0xff]
      %v293 = vld [vmem:[%s257 + $0x50] sm:$0xff]
      %v294 = vld [vmem:[%s257 + $0x58] sm:$0xff]
      %v295 = vld [vmem:[%s257 + $0x60] sm:$0xff]
      %v296 = vld [vmem:[%s257 + $0x68] sm:$0xff]
      %v297 = vld [vmem:[%s257 + $0x70] sm:$0xff]
      %v298 = vld [vmem:[%s257 + $0x78] sm:$0xff]
      %v299 = vld [vmem:[%s257 + $0x80] sm:$0xff]
      %v300 = vld [vmem:[%s257 + $0x88] sm:$0xff]
      %v301 = vld [vmem:[%s257 + $0x90] sm:$0xff]
      %v302 = vld [vmem:[%s257 + $0x98] sm:$0xff]
      %v303 = vld [vmem:[%s257 + $0xa0] sm:$0xff]
      %v304 = vld [vmem:[%s257 + $0xa8] sm:$0xff]
      %v305 = vld [vmem:[%s257 + $0xb0] sm:$0xff]
      %v306 = vld [vmem:[%s257 + $0xb8] sm:$0xff]
      %v307 = vld [vmem:[%s257 + $0xc0] sm:$0xff]
      %v308 = vld [vmem:[%s257 + $0xc8] sm:$0xff]
      %v309 = vld [vmem:[%s257 + $0xd0] sm:$0xff]
      %v310 = vld [vmem:[%s257 + $0xd8] sm:$0xff]
      %v311 = vld [vmem:[%s257 + $0xe0] sm:$0xff]
      %v312 = vld [vmem:[%s257 + $0xe8] sm:$0xff]
      %v313 = vld [vmem:[%s257 + $0xf0] sm:$0xff]
      %v314 = vld [vmem:[%s257 + $0xf8] sm:$0xff]
      %v315 = vld [vmem:[%s257 + $0x100] sm:$0xff]
      %v316 = vld [vmem:[%s257 + $0x108] sm:$0xff]
      %v317 = vld [vmem:[%s257 + $0x110] sm:$0xff]
      %v318 = vld [vmem:[%s257 + $0x118] sm:$0xff]
      %v319 = vld [vmem:[%s257 + $0x120] sm:$0xff]
      %v320 = vld [vmem:[%s257 + $0x128] sm:$0xff]
      %v321 = vld [vmem:[%s257 + $0x130] sm:$0xff]
      %v322 = vld [vmem:[%s257 + $0x138] sm:$0xff]
      %v323 = vld [vmem:[%s257 + $0x140] sm:$0xff]
      %v324 = vld [vmem:[%s257 + $0x148] sm:$0xff]
      %v325 = vld [vmem:[%s257 + $0x150] sm:$0xff]
      %v326 = vld [vmem:[%s257 + $0x158] sm:$0xff]
      %v327 = vld [vmem:[%s257 + $0x160] sm:$0xff]
      %v328 = vld [vmem:[%s257 + $0x168] sm:$0xff]
      %v329 = vld [vmem:[%s257 + $0x170] sm:$0xff]
      %v330 = vld [vmem:[%s257 + $0x178] sm:$0xff]
      %v331 = vld [vmem:[%s261] sm:$0x7]
      %v333 = vlaneseq
      %v334 = vshrl.u32 %v333, 7
      %v335 = vsub.s32 0, %v334
      %v336 = vrot.slane %v331, %v335
      %v337 = vlaneseq
      %v338 = vshrl.u32 %v337, 7
      %v339 = vsub.s32 1, %v338
      %v340 = vrot.slane %v331, %v339
      %v341 = vlaneseq
      %v342 = vshrl.u32 %v341, 7
      %v343 = vsub.s32 2, %v342
      %v344 = vrot.slane %v331, %v343
      %348 = vmatprep.subr.mxu0 %v329
      %349 = vmatpush1.msra.mxu0 %v328
      %350 = vmatprep.subr.mxu0 %v326
      %351 = vmatpush1.msra.mxu0 %v325
      %352 = vmatprep.subr.mxu0 %v323
      %353 = vmatpush1.msra.mxu0 %v322
      %354 = vmatprep.subr.mxu0 %v320
      %355 = vmatpush1.msra.mxu0 %v319
      %356 = vmatprep.subr.mxu0 %v317
      %357 = vmatpush1.msra.mxu0 %v316
      %358 = vmatprep.subr.mxu0 %v314
      %359 = vmatpush1.msra.mxu0 %v313
      %360 = vmatprep.subr.mxu0 %v311
      %361 = vmatpush1.msra.mxu0 %v310
      %362 = vmatprep.subr.mxu0 %v308
      %363 = vmatpush1.msra.mxu0 %v307
      %364 = vmatprep.subr.mxu0 %v305
      %365 = vmatpush1.msra.mxu0 %v304
      %366 = vmatprep.subr.mxu0 %v302
      %367 = vmatpush1.msra.mxu0 %v301
      %368 = vmatprep.subr.mxu0 %v299
      %369 = vmatpush1.msra.mxu0 %v298
      %370 = vmatprep.subr.mxu0 %v296
      %371 = vmatpush1.msra.mxu0 %v295
      %372 = vmatprep.subr.mxu0 %v293
      %373 = vmatpush1.msra.mxu0 %v292
      %374 = vmatprep.subr.mxu0 %v290
      %375 = vmatpush1.msra.mxu0 %v289
      %376 = vmatprep.subr.mxu0 %v287
      %377 = vmatpush1.msra.mxu0 %v286
      %378 = vmatprep.subr.mxu0 %v284
      %379 = vmatpush1.msra.mxu0 %v283
      %380 = vmatprep.subr.mxu0 0.0
      %381 = vmatpush2.msra.mxu0 0.0
      %382 = vmatprep.subr.mxu0 0.0
      %383 = vmatpush2.msra.mxu0 0.0
      %384 = vmatprep.subr.mxu0 0.0
      %385 = vmatpush2.msra.mxu0 0.0
      %386 = vmatprep.subr.mxu0 0.0
      %387 = vmatpush2.msra.mxu0 0.0
      %388 = vmatprep.subr.mxu0 0.0
      %389 = vmatpush2.msra.mxu0 0.0
      %390 = vmatprep.subr.mxu0 0.0
      %391 = vmatpush2.msra.mxu0 0.0
      %392 = vmatprep.subr.mxu0 0.0
      %393 = vmatpush2.msra.mxu0 0.0
      %394 = vmatprep.subr.mxu0 0.0
      %395 = vmatpush2.msra.mxu0 0.0
      %396 = vmatprep.subr.mxu0 0.0
      %397 = vmatpush2.msra.mxu0 0.0
      %398 = vmatprep.subr.mxu0 0.0
      %399 = vmatpush2.msra.mxu0 0.0
      %400 = vmatprep.subr.mxu0 0.0
      %401 = vmatpush2.msra.mxu0 0.0
      %402 = vmatprep.subr.mxu0 0.0
      %403 = vmatpush2.msra.mxu0 0.0
      %404 = vmatprep.subr.mxu0 0.0
      %405 = vmatpush2.msra.mxu0 0.0
      %406 = vmatprep.subr.mxu0 0.0
      %407 = vmatpush2.msra.mxu0 0.0
      %408 = vmatprep.subr.mxu0 0.0
      %409 = vmatpush2.msra.mxu0 0.0
      %410 = vmatprep.subr.mxu0 0.0
      %411 = vmatpush2.msra.mxu0 0.0
      %412 = vmatprep.mubr.f32.mxu0 0.0
      %413 = vmatmul.mubr.f32.gmra.mxu0 %v275
      %v414 = vpop.f32.mrf.mxu0
      %v415 = vadd.f32 %v336, %v414
      %v416 = vpop.f32.mrf.mxu0
      %v417 = vadd.f32 %v340, %v416
      %418 = vmatprep.mubr.f32.mxu0 0.0
      %419 = vmatmul.mubr.f32.gmra.mxu0 %v276
      %v420 = vpop.f32.mrf.mxu0
      %v421 = vadd.f32 %v336, %v420
      %v422 = vpop.f32.mrf.mxu0
      %v423 = vadd.f32 %v340, %v422
      %424 = vmatprep.mubr.f32.mxu0 0.0
      %425 = vmatmul.mubr.f32.gmra.mxu0 %v277
      %v426 = vpop.f32.mrf.mxu0
      %v427 = vadd.f32 %v336, %v426
      %v428 = vpop.f32.mrf.mxu0
      %v429 = vadd.f32 %v340, %v428
      %430 = vmatprep.mubr.f32.mxu0 0.0
      %431 = vmatmul.mubr.f32.gmra.mxu0 %v278
      %v432 = vpop.f32.mrf.mxu0
      %v433 = vadd.f32 %v336, %v432
      %v434 = vpop.f32.mrf.mxu0
      %v435 = vadd.f32 %v340, %v434
      %436 = vmatprep.mubr.f32.mxu0 0.0
      %437 = vmatmul.mubr.f32.gmra.mxu0 %v279
      %v438 = vpop.f32.mrf.mxu0
      %v439 = vadd.f32 %v336, %v438
      %v440 = vpop.f32.mrf.mxu0
      %v441 = vadd.f32 %v340, %v440
      %442 = vmatprep.mubr.f32.mxu0 0.0
      %443 = vmatmul.mubr.f32.gmra.mxu0 %v280
      %v444 = vpop.f32.mrf.mxu0
      %v445 = vadd.f32 %v336, %v444
      %v446 = vpop.f32.mrf.mxu0
      %v447 = vadd.f32 %v340, %v446
      %448 = vmatprep.mubr.f32.mxu0 0.0
      %449 = vmatmul.mubr.f32.gmra.mxu0 %v281
      %v450 = vpop.f32.mrf.mxu0
      %v451 = vadd.f32 %v336, %v450
      %v452 = vpop.f32.mrf.mxu0
      %v453 = vadd.f32 %v340, %v452
      %454 = vmatprep.mubr.f32.mxu0 0.0
      %455 = vmatmul.mubr.f32.gmra.mxu0 %v282
      %v456 = vpop.f32.mrf.mxu0
      %v457 = vadd.f32 %v336, %v456
      %v458 = vpop.f32.mrf.mxu0
      %v459 = vadd.f32 %v340, %v458
      %460 = vdwg.mxu0
      %461 = vmatprep.subr.mxu0 0.0
      %462 = vmatpush1.msra.mxu0 %v330
      %463 = vmatprep.subr.mxu0 0.0
      %464 = vmatpush1.msra.mxu0 %v327
      %465 = vmatprep.subr.mxu0 0.0
      %466 = vmatpush1.msra.mxu0 %v324
      %467 = vmatprep.subr.mxu0 0.0
      %468 = vmatpush1.msra.mxu0 %v321
      %469 = vmatprep.subr.mxu0 0.0
      %470 = vmatpush1.msra.mxu0 %v318
      %471 = vmatprep.subr.mxu0 0.0
      %472 = vmatpush1.msra.mxu0 %v315
      %473 = vmatprep.subr.mxu0 0.0
      %474 = vmatpush1.msra.mxu0 %v312
      %475 = vmatprep.subr.mxu0 0.0
      %476 = vmatpush1.msra.mxu0 %v309
      %477 = vmatprep.subr.mxu0 0.0
      %478 = vmatpush1.msra.mxu0 %v306
      %479 = vmatprep.subr.mxu0 0.0
      %480 = vmatpush1.msra.mxu0 %v303
      %481 = vmatprep.subr.mxu0 0.0
      %482 = vmatpush1.msra.mxu0 %v300
      %483 = vmatprep.subr.mxu0 0.0
      %484 = vmatpush1.msra.mxu0 %v297
      %485 = vmatprep.subr.mxu0 0.0
      %486 = vmatpush1.msra.mxu0 %v294
      %487 = vmatprep.subr.mxu0 0.0
      %488 = vmatpush1.msra.mxu0 %v291
      %489 = vmatprep.subr.mxu0 0.0
      %490 = vmatpush1.msra.mxu0 %v288
      %491 = vmatprep.subr.mxu0 0.0
      %492 = vmatpush1.msra.mxu0 %v285
      %493 = vmatprep.subr.mxu0 0.0
      %494 = vmatpush2.msra.mxu0 0.0
      %495 = vmatprep.subr.mxu0 0.0
      %496 = vmatpush2.msra.mxu0 0.0
      %497 = vmatprep.subr.mxu0 0.0
      %498 = vmatpush2.msra.mxu0 0.0
      %499 = vmatprep.subr.mxu0 0.0
      %500 = vmatpush2.msra.mxu0 0.0
      %501 = vmatprep.subr.mxu0 0.0
      %502 = vmatpush2.msra.mxu0 0.0
      %503 = vmatprep.subr.mxu0 0.0
      %504 = vmatpush2.msra.mxu0 0.0
      %505 = vmatprep.subr.mxu0 0.0
      %506 = vmatpush2.msra.mxu0 0.0
      %507 = vmatprep.subr.mxu0 0.0
      %508 = vmatpush2.msra.mxu0 0.0
      %509 = vmatprep.subr.mxu0 0.0
      %510 = vmatpush2.msra.mxu0 0.0
      %511 = vmatprep.subr.mxu0 0.0
      %512 = vmatpush2.msra.mxu0 0.0
      %513 = vmatprep.subr.mxu0 0.0
      %514 = vmatpush2.msra.mxu0 0.0
      %515 = vmatprep.subr.mxu0 0.0
      %516 = vmatpush2.msra.mxu0 0.0
      %517 = vmatprep.subr.mxu0 0.0
      %518 = vmatpush2.msra.mxu0 0.0
      %519 = vmatprep.subr.mxu0 0.0
      %520 = vmatpush2.msra.mxu0 0.0
      %521 = vmatprep.subr.mxu0 0.0
      %522 = vmatpush2.msra.mxu0 0.0
      %523 = vmatprep.subr.mxu0 0.0
      %524 = vmatpush2.msra.mxu0 0.0
      %525 = vmatprep.mubr.f32.mxu0 0.0
      %526 = vmatmul.mubr.f32.gmra.mxu0 %v275
      %v527 = vpop.f32.mrf.mxu0
      %v528 = vadd.f32 %v344, %v527
      %v529 = vpop.f32.mrf.mxu0
      %530 = vmatprep.mubr.f32.mxu0 0.0
      %531 = vmatmul.mubr.f32.gmra.mxu0 %v276
      %v532 = vpop.f32.mrf.mxu0
      %v533 = vadd.f32 %v344, %v532
      %v534 = vpop.f32.mrf.mxu0
      %535 = vmatprep.mubr.f32.mxu0 0.0
      %536 = vmatmul.mubr.f32.gmra.mxu0 %v277
      %v537 = vpop.f32.mrf.mxu0
      %v538 = vadd.f32 %v344, %v537
      %v539 = vpop.f32.mrf.mxu0
      %540 = vmatprep.mubr.f32.mxu0 0.0
      %541 = vmatmul.mubr.f32.gmra.mxu0 %v278
      %v542 = vpop.f32.mrf.mxu0
      %v543 = vadd.f32 %v344, %v542
      %v544 = vpop.f32.mrf.mxu0
      %545 = vmatprep.mubr.f32.mxu0 0.0
      %546 = vmatmul.mubr.f32.gmra.mxu0 %v279
      %v547 = vpop.f32.mrf.mxu0
      %v548 = vadd.f32 %v344, %v547
      %v549 = vpop.f32.mrf.mxu0
      %550 = vmatprep.mubr.f32.mxu0 0.0
      %551 = vmatmul.mubr.f32.gmra.mxu0 %v280
      %v552 = vpop.f32.mrf.mxu0
      %v553 = vadd.f32 %v344, %v552
      %v554 = vpop.f32.mrf.mxu0
      %555 = vmatprep.mubr.f32.mxu0 0.0
      %556 = vmatmul.mubr.f32.gmra.mxu0 %v281
      %v557 = vpop.f32.mrf.mxu0
      %v558 = vadd.f32 %v344, %v557
      %v559 = vpop.f32.mrf.mxu0
      %560 = vmatprep.mubr.f32.mxu0 0.0
      %561 = vmatmul.mubr.f32.gmra.mxu0 %v282
      %v562 = vpop.f32.mrf.mxu0
      %v563 = vadd.f32 %v344, %v562
      %v564 = vpop.f32.mrf.mxu0
      %565 = vdwg.mxu0
      %566 = vst [vmem:[#allocation2] sm:$0xff] %v415
      %567 = vst [vmem:[#allocation2 + $0x8] sm:$0xff] %v417
      %568 = vst [vmem:[#allocation2 + $0x10] sm:$0xff] %v528
      %569 = vst [vmem:[#allocation2 + $0x18] sm:$0xff] %v421
      %570 = vst [vmem:[#allocation2 + $0x20] sm:$0xff] %v423
      %571 = vst [vmem:[#allocation2 + $0x28] sm:$0xff] %v533
      %572 = vst [vmem:[#allocation2 + $0x30] sm:$0xff] %v427
      %573 = vst [vmem:[#allocation2 + $0x38] sm:$0xff] %v429
      %574 = vst [vmem:[#allocation2 + $0x40] sm:$0xff] %v538
      %575 = vst [vmem:[#allocation2 + $0x48] sm:$0xff] %v433
      %576 = vst [vmem:[#allocation2 + $0x50] sm:$0xff] %v435
      %577 = vst [vmem:[#allocation2 + $0x58] sm:$0xff] %v543
      %578 = vst [vmem:[#allocation2 + $0x60] sm:$0xff] %v439
      %579 = vst [vmem:[#allocation2 + $0x68] sm:$0xff] %v441
      %580 = vst [vmem:[#allocation2 + $0x70] sm:$0xff] %v548
      %581 = vst [vmem:[#allocation2 + $0x78] sm:$0xff] %v445
      %582 = vst [vmem:[#allocation2 + $0x80] sm:$0xff] %v447
      %583 = vst [vmem:[#allocation2 + $0x88] sm:$0xff] %v553
      %584 = vst [vmem:[#allocation2 + $0x90] sm:$0xff] %v451
      %585 = vst [vmem:[#allocation2 + $0x98] sm:$0xff] %v453
      %586 = vst [vmem:[#allocation2 + $0xa0] sm:$0xff] %v558
      %587 = vst [vmem:[#allocation2 + $0xa8] sm:$0xff] %v457
      %588 = vst [vmem:[#allocation2 + $0xb0] sm:$0xff] %v459
      %589 = vst [vmem:[#allocation2 + $0xb8] sm:$0xff] %v563
      %v590 = vld [vmem:[%s266] sm:$0xff]
      %v591 = vld [vmem:[%s266 + $0x8] sm:$0xff]
      %v592 = vld [vmem:[%s266 + $0x10] sm:$0xff]
      %v593 = vld [vmem:[%s266 + $0x18] sm:$0xff]
      %v594 = vld [vmem:[%s266 + $0x20] sm:$0xff]
      %v595 = vld [vmem:[%s266 + $0x28] sm:$0xff]
      %v596 = vld [vmem:[%s266 + $0x30] sm:$0xff]
      %v597 = vld [vmem:[%s266 + $0x38] sm:$0xff]
      %v598 = vld [vmem:[%s266 + $0x40] sm:$0xff]
      %v599 = vld [vmem:[%s266 + $0x48] sm:$0xff]
      %v600 = vld [vmem:[%s266 + $0x50] sm:$0xff]
      %v601 = vld [vmem:[%s266 + $0x58] sm:$0xff]
      %v602 = vld [vmem:[%s266 + $0x60] sm:$0xff]
      %v603 = vld [vmem:[%s266 + $0x68] sm:$0xff]
      %v604 = vld [vmem:[%s266 + $0x70] sm:$0xff]
      %v605 = vld [vmem:[%s266 + $0x78] sm:$0xff]
      %v606 = vld [vmem:[%s266 + $0x80] sm:$0xff]
      %v607 = vld [vmem:[%s266 + $0x88] sm:$0xff]
      %v608 = vld [vmem:[%s266 + $0x90] sm:$0xff]
      %v609 = vld [vmem:[%s266 + $0x98] sm:$0xff]
      %v610 = vld [vmem:[%s266 + $0xa0] sm:$0xff]
      %v611 = vld [vmem:[%s266 + $0xa8] sm:$0xff]
      %v612 = vld [vmem:[%s266 + $0xb0] sm:$0xff]
      %v613 = vld [vmem:[%s266 + $0xb8] sm:$0xff]
      %v614 = vld [vmem:[%s266 + $0xc0] sm:$0xff]
      %v615 = vld [vmem:[%s266 + $0xc8] sm:$0xff]
      %v616 = vld [vmem:[%s266 + $0xd0] sm:$0xff]
      %v617 = vld [vmem:[%s266 + $0xd8] sm:$0xff]
      %v618 = vld [vmem:[%s266 + $0xe0] sm:$0xff]
      %v619 = vld [vmem:[%s266 + $0xe8] sm:$0xff]
      %v620 = vld [vmem:[%s266 + $0xf0] sm:$0xff]
      %v621 = vld [vmem:[%s266 + $0xf8] sm:$0xff]
      %v622 = vld [vmem:[%s266 + $0x100] sm:$0xff]
      %v623 = vld [vmem:[%s266 + $0x108] sm:$0xff]
      %v624 = vld [vmem:[%s266 + $0x110] sm:$0xff]
      %v625 = vld [vmem:[%s266 + $0x118] sm:$0xff]
      %v626 = vld [vmem:[%s266 + $0x120] sm:$0xff]
      %v627 = vld [vmem:[%s266 + $0x128] sm:$0xff]
      %v628 = vld [vmem:[%s266 + $0x130] sm:$0xff]
      %v629 = vld [vmem:[%s266 + $0x138] sm:$0xff]
      %v630 = vld [vmem:[%s266 + $0x140] sm:$0xff]
      %v631 = vld [vmem:[%s266 + $0x148] sm:$0xff]
      %v632 = vld [vmem:[%s266 + $0x150] sm:$0xff]
      %v633 = vld [vmem:[%s266 + $0x158] sm:$0xff]
      %v634 = vld [vmem:[%s266 + $0x160] sm:$0xff]
      %v635 = vld [vmem:[%s266 + $0x168] sm:$0xff]
      %v636 = vld [vmem:[%s266 + $0x170] sm:$0xff]
      %v637 = vld [vmem:[%s266 + $0x178] sm:$0xff]
      %v638 = vld [vmem:[%s269] sm:$0x1]
      %v640 = vlaneseq
      %v641 = vshrl.u32 %v640, 7
      %v642 = vsub.s32 0, %v641
      %v643 = vrot.slane %v638, %v642
      %s645 = scalar_select %p274, 56, 0
      %s646 = sshra.s32 %s645, 3
      %s647 = sand.u32 %s645, 7
      %s648 = smul.u32 %s646, 3
      %s649 = smul.addr %s648, 8
      %s650 = scalar_lea.vmem [#allocation2], %s649
      %v651 = vld [vmem:[%s650] sm:$0xff]
      %v652 = vld [vmem:[%s650 + $0x8] sm:$0xff]
      %v653 = vld [vmem:[%s650 + $0x10] sm:$0xff]
      %654 = vmatprep.subr.mxu0 %v636
      %655 = vmatpush1.msra.mxu0 %v635
      %656 = vmatprep.subr.mxu0 %v633
      %657 = vmatpush1.msra.mxu0 %v632
      %658 = vmatprep.subr.mxu0 %v630
      %659 = vmatpush1.msra.mxu0 %v629
      %660 = vmatprep.subr.mxu0 %v627
      %661 = vmatpush1.msra.mxu0 %v626
      %662 = vmatprep.subr.mxu0 %v624
      %663 = vmatpush1.msra.mxu0 %v623
      %664 = vmatprep.subr.mxu0 %v621
      %665 = vmatpush1.msra.mxu0 %v620
      %666 = vmatprep.subr.mxu0 %v618
      %667 = vmatpush1.msra.mxu0 %v617
      %668 = vmatprep.subr.mxu0 %v615
      %669 = vmatpush1.msra.mxu0 %v614
      %670 = vmatprep.subr.mxu0 %v612
      %671 = vmatpush1.msra.mxu0 %v611
      %672 = vmatprep.subr.mxu0 %v609
      %673 = vmatpush1.msra.mxu0 %v608
      %674 = vmatprep.subr.mxu0 %v606
      %675 = vmatpush1.msra.mxu0 %v605
      %676 = vmatprep.subr.mxu0 %v603
      %677 = vmatpush1.msra.mxu0 %v602
      %678 = vmatprep.subr.mxu0 %v600
      %679 = vmatpush1.msra.mxu0 %v599
      %680 = vmatprep.subr.mxu0 %v597
      %681 = vmatpush1.msra.mxu0 %v596
      %682 = vmatprep.subr.mxu0 %v594
      %683 = vmatpush1.msra.mxu0 %v593
      %684 = vmatprep.subr.mxu0 %v591
      %685 = vmatpush1.msra.mxu0 %v590
      %686 = vmatprep.subr.mxu0 0.0
      %687 = vmatpush2.msra.mxu0 0.0
      %688 = vmatprep.subr.mxu0 0.0
      %689 = vmatpush2.msra.mxu0 0.0
      %690 = vmatprep.subr.mxu0 0.0
      %691 = vmatpush2.msra.mxu0 0.0
      %692 = vmatprep.subr.mxu0 0.0
      %693 = vmatpush2.msra.mxu0 0.0
      %694 = vmatprep.subr.mxu0 0.0
      %695 = vmatpush2.msra.mxu0 0.0
      %696 = vmatprep.subr.mxu0 0.0
      %697 = vmatpush2.msra.mxu0 0.0
      %698 = vmatprep.subr.mxu0 0.0
      %699 = vmatpush2.msra.mxu0 0.0
      %700 = vmatprep.subr.mxu0 0.0
      %701 = vmatpush2.msra.mxu0 0.0
      %702 = vmatprep.subr.mxu0 0.0
      %703 = vmatpush2.msra.mxu0 0.0
      %704 = vmatprep.subr.mxu0 0.0
      %705 = vmatpush2.msra.mxu0 0.0
      %706 = vmatprep.subr.mxu0 0.0
      %707 = vmatpush2.msra.mxu0 0.0
      %708 = vmatprep.subr.mxu0 0.0
      %709 = vmatpush2.msra.mxu0 0.0
      %710 = vmatprep.subr.mxu0 0.0
      %711 = vmatpush2.msra.mxu0 0.0
      %712 = vmatprep.subr.mxu0 0.0
      %713 = vmatpush2.msra.mxu0 0.0
      %714 = vmatprep.subr.mxu0 0.0
      %715 = vmatpush2.msra.mxu0 0.0
      %716 = vmatprep.subr.mxu0 0.0
      %717 = vmatpush2.msra.mxu0 0.0
      %718 = vmatprep.mubr.f32.mxu0 0.0
      %719 = vmatmul.mubr.f32.gmra.mxu0 0.0
      %v720 = vpop.f32.mrf.mxu0
      %v721 = vadd.f32 0.0, %v720
      %v722 = vpop.f32.mrf.mxu0
      %v723 = vadd.f32 0.0, %v722
      %724 = vdwg.mxu0
      %725 = vmatprep.subr.mxu0 0.0
      %726 = vmatpush1.msra.mxu0 %v637
      %727 = vmatprep.subr.mxu0 0.0
      %728 = vmatpush1.msra.mxu0 %v634
      %729 = vmatprep.subr.mxu0 0.0
      %730 = vmatpush1.msra.mxu0 %v631
      %731 = vmatprep.subr.mxu0 0.0
      %732 = vmatpush1.msra.mxu0 %v628
      %733 = vmatprep.subr.mxu0 0.0
      %734 = vmatpush1.msra.mxu0 %v625
      %735 = vmatprep.subr.mxu0 0.0
      %736 = vmatpush1.msra.mxu0 %v622
      %737 = vmatprep.subr.mxu0 0.0
      %738 = vmatpush1.msra.mxu0 %v619
      %739 = vmatprep.subr.mxu0 0.0
      %740 = vmatpush1.msra.mxu0 %v616
      %741 = vmatprep.subr.mxu0 0.0
      %742 = vmatpush1.msra.mxu0 %v613
      %743 = vmatprep.subr.mxu0 0.0
      %744 = vmatpush1.msra.mxu0 %v610
      %745 = vmatprep.subr.mxu0 0.0
      %746 = vmatpush1.msra.mxu0 %v607
      %747 = vmatprep.subr.mxu0 0.0
      %748 = vmatpush1.msra.mxu0 %v604
      %749 = vmatprep.subr.mxu0 0.0
      %750 = vmatpush1.msra.mxu0 %v601
      %751 = vmatprep.subr.mxu0 0.0
      %752 = vmatpush1.msra.mxu0 %v598
      %753 = vmatprep.subr.mxu0 0.0
      %754 = vmatpush1.msra.mxu0 %v595
      %755 = vmatprep.subr.mxu0 0.0
      %756 = vmatpush1.msra.mxu0 %v592
      %757 = vmatprep.subr.mxu0 0.0
      %758 = vmatpush2.msra.mxu0 0.0
      %759 = vmatprep.subr.mxu0 0.0
      %760 = vmatpush2.msra.mxu0 0.0
      %761 = vmatprep.subr.mxu0 0.0
      %762 = vmatpush2.msra.mxu0 0.0
      %763 = vmatprep.subr.mxu0 0.0
      %764 = vmatpush2.msra.mxu0 0.0
      %765 = vmatprep.subr.mxu0 0.0
      %766 = vmatpush2.msra.mxu0 0.0
      %767 = vmatprep.subr.mxu0 0.0
      %768 = vmatpush2.msra.mxu0 0.0
      %769 = vmatprep.subr.mxu0 0.0
      %770 = vmatpush2.msra.mxu0 0.0
      %771 = vmatprep.subr.mxu0 0.0
      %772 = vmatpush2.msra.mxu0 0.0
      %773 = vmatprep.subr.mxu0 0.0
      %774 = vmatpush2.msra.mxu0 0.0
      %775 = vmatprep.subr.mxu0 0.0
      %776 = vmatpush2.msra.mxu0 0.0
      %777 = vmatprep.subr.mxu0 0.0
      %778 = vmatpush2.msra.mxu0 0.0
      %779 = vmatprep.subr.mxu0 0.0
      %780 = vmatpush2.msra.mxu0 0.0
      %781 = vmatprep.subr.mxu0 0.0
      %782 = vmatpush2.msra.mxu0 0.0
      %783 = vmatprep.subr.mxu0 0.0
      %784 = vmatpush2.msra.mxu0 0.0
      %785 = vmatprep.subr.mxu0 0.0
      %786 = vmatpush2.msra.mxu0 0.0
      %787 = vmatprep.subr.mxu0 0.0
      %788 = vmatpush2.msra.mxu0 0.0
      %789 = vmatprep.mubr.f32.mxu0 0.0
      %790 = vmatmul.mubr.f32.gmra.mxu0 0.0
      %v791 = vpop.f32.mrf.mxu0
      %v792 = vadd.f32 0.0, %v791
      %v793 = vpop.f32.mrf.mxu0
      %794 = vdwg.mxu0
      %v795 = vadd.f32 %v651, %v721
      %v796 = vxor.u32 %v795, 2147483648
      %v797 = vmul.f32 %v796, 1.442695
      %v798 = vpow.pop %v797
      %v799 = vadd.f32 %v798, 1.0
      %v800 = vrcp.pop %v799
      %v801 = vmul.f32 1.0, %v800
      %v802 = vadd.f32 %v652, %v723
      %v803 = vxor.u32 %v802, 2147483648
      %v804 = vmul.f32 %v803, 1.442695
      %v805 = vpow.pop %v804
      %v806 = vadd.f32 %v805, 1.0
      %v807 = vrcp.pop %v806
      %v808 = vmul.f32 1.0, %v807
      %v809 = vadd.f32 %v792, %v643
      %v810 = vmul.f32 %v801, %v809
      %v811 = vadd.f32 %v653, %v810
      %v812 = vtanh.pop %v811
      %v813 = vsub.f32 1.0, %v808
      %v814 = vmul.f32 %v813, %v812
      %v815 = vmul.f32 %v808, 0.0
      %v816 = vadd.f32 %v814, %v815
      %s817 = scalar_select %p274, 48, 8
      %s818 = sshra.s32 %s817, 3
      %s819 = sand.u32 %s817, 7
      %s820 = smul.u32 %s818, 3
      %s821 = smul.addr %s820, 8
      %s822 = scalar_lea.vmem [#allocation2], %s821
      %v823 = vld [vmem:[%s822] sm:$0xff]
      %v824 = vld [vmem:[%s822 + $0x8] sm:$0xff]
      %v825 = vld [vmem:[%s822 + $0x10] sm:$0xff]
      %826 = vmatprep.subr.mxu0 %v636
      %827 = vmatpush1.msra.mxu0 %v635
      %828 = vmatprep.subr.mxu0 %v633
      %829 = vmatpush1.msra.mxu0 %v632
      %830 = vmatprep.subr.mxu0 %v630
      %831 = vmatpush1.msra.mxu0 %v629
      %832 = vmatprep.subr.mxu0 %v627
      %833 = vmatpush1.msra.mxu0 %v626
      %834 = vmatprep.subr.mxu0 %v624
      %835 = vmatpush1.msra.mxu0 %v623
      %836 = vmatprep.subr.mxu0 %v621
      %837 = vmatpush1.msra.mxu0 %v620
      %838 = vmatprep.subr.mxu0 %v618
      %839 = vmatpush1.msra.mxu0 %v617
      %840 = vmatprep.subr.mxu0 %v615
      %841 = vmatpush1.msra.mxu0 %v614
      %842 = vmatprep.subr.mxu0 %v612
      %843 = vmatpush1.msra.mxu0 %v611
      %844 = vmatprep.subr.mxu0 %v609
      %845 = vmatpush1.msra.mxu0 %v608
      %846 = vmatprep.subr.mxu0 %v606
      %847 = vmatpush1.msra.mxu0 %v605
      %848 = vmatprep.subr.mxu0 %v603
      %849 = vmatpush1.msra.mxu0 %v602
      %850 = vmatprep.subr.mxu0 %v600
      %851 = vmatpush1.msra.mxu0 %v599
      %852 = vmatprep.subr.mxu0 %v597
      %853 = vmatpush1.msra.mxu0 %v596
      %854 = vmatprep.subr.mxu0 %v594
      %855 = vmatpush1.msra.mxu0 %v593
      %856 = vmatprep.subr.mxu0 %v591
      %857 = vmatpush1.msra.mxu0 %v590
      %858 = vmatprep.subr.mxu0 0.0
      %859 = vmatpush2.msra.mxu0 0.0
      %860 = vmatprep.subr.mxu0 0.0
      %861 = vmatpush2.msra.mxu0 0.0
      %862 = vmatprep.subr.mxu0 0.0
      %863 = vmatpush2.msra.mxu0 0.0
      %864 = vmatprep.subr.mxu0 0.0
      %865 = vmatpush2.msra.mxu0 0.0
      %866 = vmatprep.subr.mxu0 0.0
      %867 = vmatpush2.msra.mxu0 0.0
      %868 = vmatprep.subr.mxu0 0.0
      %869 = vmatpush2.msra.mxu0 0.0
      %870 = vmatprep.subr.mxu0 0.0
      %871 = vmatpush2.msra.mxu0 0.0
      %872 = vmatprep.subr.mxu0 0.0
      %873 = vmatpush2.msra.mxu0 0.0
      %874 = vmatprep.subr.mxu0 0.0
      %875 = vmatpush2.msra.mxu0 0.0
      %876 = vmatprep.subr.mxu0 0.0
      %877 = vmatpush2.msra.mxu0 0.0
      %878 = vmatprep.subr.mxu0 0.0
      %879 = vmatpush2.msra.mxu0 0.0
      %880 = vmatprep.subr.mxu0 0.0
      %881 = vmatpush2.msra.mxu0 0.0
      %882 = vmatprep.subr.mxu0 0.0
      %883 = vmatpush2.msra.mxu0 0.0
      %884 = vmatprep.subr.mxu0 0.0
      %885 = vmatpush2.msra.mxu0 0.0
      %886 = vmatprep.subr.mxu0 0.0
      %887 = vmatpush2.msra.mxu0 0.0
      %888 = vmatprep.subr.mxu0 0.0
      %889 = vmatpush2.msra.mxu0 0.0
      %890 = vmatprep.mubr.f32.mxu0 0.0
      %891 = vmatmul.mubr.f32.gmra.mxu0 %v816
      %v892 = vpop.f32.mrf.mxu0
      %v893 = vadd.f32 0.0, %v892
      %v894 = vpop.f32.mrf.mxu0
      %v895 = vadd.f32 0.0, %v894
      %896 = vdwg.mxu0
      %897 = vmatprep.subr.mxu0 0.0
      %898 = vmatpush1.msra.mxu0 %v637
      %899 = vmatprep.subr.mxu0 0.0
      %900 = vmatpush1.msra.mxu0 %v634
      %901 = vmatprep.subr.mxu0 0.0
      %902 = vmatpush1.msra.mxu0 %v631
      %903 = vmatprep.subr.mxu0 0.0
      %904 = vmatpush1.msra.mxu0 %v628
      %905 = vmatprep.subr.mxu0 0.0
      %906 = vmatpush1.msra.mxu0 %v625
      %907 = vmatprep.subr.mxu0 0.0
      %908 = vmatpush1.msra.mxu0 %v622
      %909 = vmatprep.subr.mxu0 0.0
      %910 = vmatpush1.msra.mxu0 %v619
      %911 = vmatprep.subr.mxu0 0.0
      %912 = vmatpush1.msra.mxu0 %v616
      %913 = vmatprep.subr.mxu0 0.0
      %914 = vmatpush1.msra.mxu0 %v613
      %915 = vmatprep.subr.mxu0 0.0
      %916 = vmatpush1.msra.mxu0 %v610
      %917 = vmatprep.subr.mxu0 0.0
      %918 = vmatpush1.msra.mxu0 %v607
      %919 = vmatprep.subr.mxu0 0.0
      %920 = vmatpush1.msra.mxu0 %v604
      %921 = vmatprep.subr.mxu0 0.0
      %922 = vmatpush1.msra.mxu0 %v601
      %923 = vmatprep.subr.mxu0 0.0
      %924 = vmatpush1.msra.mxu0 %v598
      %925 = vmatprep.subr.mxu0 0.0
      %926 = vmatpush1.msra.mxu0 %v595
      %927 = vmatprep.subr.mxu0 0.0
      %928 = vmatpush1.msra.mxu0 %v592
      %929 = vmatprep.subr.mxu0 0.0
      %930 = vmatpush2.msra.mxu0 0.0
      %931 = vmatprep.subr.mxu0 0.0
      %932 = vmatpush2.msra.mxu0 0.0
      %933 = vmatprep.subr.mxu0 0.0
      %934 = vmatpush2.msra.mxu0 0.0
      %935 = vmatprep.subr.mxu0 0.0
      %936 = vmatpush2.msra.mxu0 0.0
      %937 = vmatprep.subr.mxu0 0.0
      %938 = vmatpush2.msra.mxu0 0.0
      %939 = vmatprep.subr.mxu0 0.0
      %940 = vmatpush2.msra.mxu0 0.0
      %941 = vmatprep.subr.mxu0 0.0
      %942 = vmatpush2.msra.mxu0 0.0
      %943 = vmatprep.subr.mxu0 0.0
      %944 = vmatpush2.msra.mxu0 0.0
      %945 = vmatprep.subr.mxu0 0.0
      %946 = vmatpush2.msra.mxu0 0.0
      %947 = vmatprep.subr.mxu0 0.0
      %948 = vmatpush2.msra.mxu0 0.0
      %949 = vmatprep.subr.mxu0 0.0
      %950 = vmatpush2.msra.mxu0 0.0
      %951 = vmatprep.subr.mxu0 0.0
      %952 = vmatpush2.msra.mxu0 0.0
      %953 = vmatprep.subr.mxu0 0.0
      %954 = vmatpush2.msra.mxu0 0.0
      %955 = vmatprep.subr.mxu0 0.0
      %956 = vmatpush2.msra.mxu0 0.0
      %957 = vmatprep.subr.mxu0 0.0
      %958 = vmatpush2.msra.mxu0 0.0
      %959 = vmatprep.subr.mxu0 0.0
      %960 = vmatpush2.msra.mxu0 0.0
      %961 = vmatprep.mubr.f32.mxu0 0.0
      %962 = vmatmul.mubr.f32.gmra.mxu0 %v816
      %v963 = vpop.f32.mrf.mxu0
      %v964 = vadd.f32 0.0, %v963
      %v965 = vpop.f32.mrf.mxu0
      %966 = vdwg.mxu0
      %v967 = vadd.f32 %v823, %v893
      %v968 = vxor.u32 %v967, 2147483648
      %v969 = vmul.f32 %v968, 1.442695
      %v970 = vpow.pop %v969
      %v971 = vadd.f32 %v970, 1.0
      %v972 = vrcp.pop %v971
      %v973 = vmul.f32 1.0, %v972
      %v974 = vadd.f32 %v824, %v895
      %v975 = vxor.u32 %v974, 2147483648
      %v976 = vmul.f32 %v975, 1.442695
      %v977 = vpow.pop %v976
      %v978 = vadd.f32 %v977, 1.0
      %v979 = vrcp.pop %v978
      %v980 = vmul.f32 1.0, %v979
      %v981 = vadd.f32 %v964, %v643
      %v982 = vmul.f32 %v973, %v981
      %v983 = vadd.f32 %v825, %v982
      %v984 = vtanh.pop %v983
      %v985 = vsub.f32 1.0, %v980
      %v986 = vmul.f32 %v985, %v984
      %v987 = vmul.f32 %v980, %v816
      %v988 = vadd.f32 %v986, %v987
      %s989 = scalar_select %p274, 40, 16
      %s990 = sshra.s32 %s989, 3
      %s991 = sand.u32 %s989, 7
      %s992 = smul.u32 %s990, 3
      %s993 = smul.addr %s992, 8
      %s994 = scalar_lea.vmem [#allocation2], %s993
      %v995 = vld [vmem:[%s994] sm:$0xff]
      %v996 = vld [vmem:[%s994 + $0x8] sm:$0xff]
      %v997 = vld [vmem:[%s994 + $0x10] sm:$0xff]
      %998 = vmatprep.subr.mxu0 %v636
      %999 = vmatpush1.msra.mxu0 %v635
      %1000 = vmatprep.subr.mxu0 %v633
      %1001 = vmatpush1.msra.mxu0 %v632
      %1002 = vmatprep.subr.mxu0 %v630
      %1003 = vmatpush1.msra.mxu0 %v629
      %1004 = vmatprep.subr.mxu0 %v627
      %1005 = vmatpush1.msra.mxu0 %v626
      %1006 = vmatprep.subr.mxu0 %v624
      %1007 = vmatpush1.msra.mxu0 %v623
      %1008 = vmatprep.subr.mxu0 %v621
      %1009 = vmatpush1.msra.mxu0 %v620
      %1010 = vmatprep.subr.mxu0 %v618
      %1011 = vmatpush1.msra.mxu0 %v617
      %1012 = vmatprep.subr.mxu0 %v615
      %1013 = vmatpush1.msra.mxu0 %v614
      %1014 = vmatprep.subr.mxu0 %v612
      %1015 = vmatpush1.msra.mxu0 %v611
      %1016 = vmatprep.subr.mxu0 %v609
      %1017 = vmatpush1.msra.mxu0 %v608
      %1018 = vmatprep.subr.mxu0 %v606
      %1019 = vmatpush1.msra.mxu0 %v605
      %1020 = vmatprep.subr.mxu0 %v603
      %1021 = vmatpush1.msra.mxu0 %v602
      %1022 = vmatprep.subr.mxu0 %v600
      %1023 = vmatpush1.msra.mxu0 %v599
      %1024 = vmatprep.subr.mxu0 %v597
      %1025 = vmatpush1.msra.mxu0 %v596
      %1026 = vmatprep.subr.mxu0 %v594
      %1027 = vmatpush1.msra.mxu0 %v593
      %1028 = vmatprep.subr.mxu0 %v591
      %1029 = vmatpush1.msra.mxu0 %v590
      %1030 = vmatprep.subr.mxu0 0.0
      %1031 = vmatpush2.msra.mxu0 0.0
      %1032 = vmatprep.subr.mxu0 0.0
      %1033 = vmatpush2.msra.mxu0 0.0
      %1034 = vmatprep.subr.mxu0 0.0
      %1035 = vmatpush2.msra.mxu0 0.0
      %1036 = vmatprep.subr.mxu0 0.0
      %1037 = vmatpush2.msra.mxu0 0.0
      %1038 = vmatprep.subr.mxu0 0.0
      %1039 = vmatpush2.msra.mxu0 0.0
      %1040 = vmatprep.subr.mxu0 0.0
      %1041 = vmatpush2.msra.mxu0 0.0
      %1042 = vmatprep.subr.mxu0 0.0
      %1043 = vmatpush2.msra.mxu0 0.0
      %1044 = vmatprep.subr.mxu0 0.0
      %1045 = vmatpush2.msra.mxu0 0.0
      %1046 = vmatprep.subr.mxu0 0.0
      %1047 = vmatpush2.msra.mxu0 0.0
      %1048 = vmatprep.subr.mxu0 0.0
      %1049 = vmatpush2.msra.mxu0 0.0
      %1050 = vmatprep.subr.mxu0 0.0
      %1051 = vmatpush2.msra.mxu0 0.0
      %1052 = vmatprep.subr.mxu0 0.0
      %1053 = vmatpush2.msra.mxu0 0.0
      %1054 = vmatprep.subr.mxu0 0.0
      %1055 = vmatpush2.msra.mxu0 0.0
      %1056 = vmatprep.subr.mxu0 0.0
      %1057 = vmatpush2.msra.mxu0 0.0
      %1058 = vmatprep.subr.mxu0 0.0
      %1059 = vmatpush2.msra.mxu0 0.0
      %1060 = vmatprep.subr.mxu0 0.0
      %1061 = vmatpush2.msra.mxu0 0.0
      %1062 = vmatprep.mubr.f32.mxu0 0.0
      %1063 = vmatmul.mubr.f32.gmra.mxu0 %v988
      %v1064 = vpop.f32.mrf.mxu0
      %v1065 = vadd.f32 0.0, %v1064
      %v1066 = vpop.f32.mrf.mxu0
      %v1067 = vadd.f32 0.0, %v1066
      %1068 = vdwg.mxu0
      %1069 = vmatprep.subr.mxu0 0.0
      %1070 = vmatpush1.msra.mxu0 %v637
      %1071 = vmatprep.subr.mxu0 0.0
      %1072 = vmatpush1.msra.mxu0 %v634
      %1073 = vmatprep.subr.mxu0 0.0
      %1074 = vmatpush1.msra.mxu0 %v631
      %1075 = vmatprep.subr.mxu0 0.0
      %1076 = vmatpush1.msra.mxu0 %v628
      %1077 = vmatprep.subr.mxu0 0.0
      %1078 = vmatpush1.msra.mxu0 %v625
      %1079 = vmatprep.subr.mxu0 0.0
      %1080 = vmatpush1.msra.mxu0 %v622
      %1081 = vmatprep.subr.mxu0 0.0
      %1082 = vmatpush1.msra.mxu0 %v619
      %1083 = vmatprep.subr.mxu0 0.0
      %1084 = vmatpush1.msra.mxu0 %v616
      %1085 = vmatprep.subr.mxu0 0.0
      %1086 = vmatpush1.msra.mxu0 %v613
      %1087 = vmatprep.subr.mxu0 0.0
      %1088 = vmatpush1.msra.mxu0 %v610
      %1089 = vmatprep.subr.mxu0 0.0
      %1090 = vmatpush1.msra.mxu0 %v607
      %1091 = vmatprep.subr.mxu0 0.0
      %1092 = vmatpush1.msra.mxu0 %v604
      %1093 = vmatprep.subr.mxu0 0.0
      %1094 = vmatpush1.msra.mxu0 %v601
      %1095 = vmatprep.subr.mxu0 0.0
      %1096 = vmatpush1.msra.mxu0 %v598
      %1097 = vmatprep.subr.mxu0 0.0
      %1098 = vmatpush1.msra.mxu0 %v595
      %1099 = vmatprep.subr.mxu0 0.0
      %1100 = vmatpush1.msra.mxu0 %v592
      %1101 = vmatprep.subr.mxu0 0.0
      %1102 = vmatpush2.msra.mxu0 0.0
      %1103 = vmatprep.subr.mxu0 0.0
      %1104 = vmatpush2.msra.mxu0 0.0
      %1105 = vmatprep.subr.mxu0 0.0
      %1106 = vmatpush2.msra.mxu0 0.0
      %1107 = vmatprep.subr.mxu0 0.0
      %1108 = vmatpush2.msra.mxu0 0.0
      %1109 = vmatprep.subr.mxu0 0.0
      %1110 = vmatpush2.msra.mxu0 0.0
      %1111 = vmatprep.subr.mxu0 0.0
      %1112 = vmatpush2.msra.mxu0 0.0
      %1113 = vmatprep.subr.mxu0 0.0
      %1114 = vmatpush2.msra.mxu0 0.0
      %1115 = vmatprep.subr.mxu0 0.0
      %1116 = vmatpush2.msra.mxu0 0.0
      %1117 = vmatprep.subr.mxu0 0.0
      %1118 = vmatpush2.msra.mxu0 0.0
      %1119 = vmatprep.subr.mxu0 0.0
      %1120 = vmatpush2.msra.mxu0 0.0
      %1121 = vmatprep.subr.mxu0 0.0
      %1122 = vmatpush2.msra.mxu0 0.0
      %1123 = vmatprep.subr.mxu0 0.0
      %1124 = vmatpush2.msra.mxu0 0.0
      %1125 = vmatprep.subr.mxu0 0.0
      %1126 = vmatpush2.msra.mxu0 0.0
      %1127 = vmatprep.subr.mxu0 0.0
      %1128 = vmatpush2.msra.mxu0 0.0
      %1129 = vmatprep.subr.mxu0 0.0
      %1130 = vmatpush2.msra.mxu0 0.0
      %1131 = vmatprep.subr.mxu0 0.0
      %1132 = vmatpush2.msra.mxu0 0.0
      %1133 = vmatprep.mubr.f32.mxu0 0.0
      %1134 = vmatmul.mubr.f32.gmra.mxu0 %v988
      %v1135 = vpop.f32.mrf.mxu0
      %v1136 = vadd.f32 0.0, %v1135
      %v1137 = vpop.f32.mrf.mxu0
      %1138 = vdwg.mxu0
      %v1139 = vadd.f32 %v995, %v1065
      %v1140 = vxor.u32 %v1139, 2147483648
      %v1141 = vmul.f32 %v1140, 1.442695
      %v1142 = vpow.pop %v1141
      %v1143 = vadd.f32 %v1142, 1.0
      %v1144 = vrcp.pop %v1143
      %v1145 = vmul.f32 1.0, %v1144
      %v1146 = vadd.f32 %v996, %v1067
      %v1147 = vxor.u32 %v1146, 2147483648
      %v1148 = vmul.f32 %v1147, 1.442695
      %v1149 = vpow.pop %v1148
      %v1150 = vadd.f32 %v1149, 1.0
      %v1151 = vrcp.pop %v1150
      %v1152 = vmul.f32 1.0, %v1151
      %v1153 = vadd.f32 %v1136, %v643
      %v1154 = vmul.f32 %v1145, %v1153
      %v1155 = vadd.f32 %v997, %v1154
      %v1156 = vtanh.pop %v1155
      %v1157 = vsub.f32 1.0, %v1152
      %v1158 = vmul.f32 %v1157, %v1156
      %v1159 = vmul.f32 %v1152, %v988
      %v1160 = vadd.f32 %v1158, %v1159
      %s1161 = scalar_select %p274, 32, 24
      %s1162 = sshra.s32 %s1161, 3
      %s1163 = sand.u32 %s1161, 7
      %s1164 = smul.u32 %s1162, 3
      %s1165 = smul.addr %s1164, 8
      %s1166 = scalar_lea.vmem [#allocation2], %s1165
      %v1167 = vld [vmem:[%s1166] sm:$0xff]
      %v1168 = vld [vmem:[%s1166 + $0x8] sm:$0xff]
      %v1169 = vld [vmem:[%s1166 + $0x10] sm:$0xff]
      %1170 = vmatprep.subr.mxu0 %v636
      %1171 = vmatpush1.msra.mxu0 %v635
      %1172 = vmatprep.subr.mxu0 %v633
      %1173 = vmatpush1.msra.mxu0 %v632
      %1174 = vmatprep.subr.mxu0 %v630
      %1175 = vmatpush1.msra.mxu0 %v629
      %1176 = vmatprep.subr.mxu0 %v627
      %1177 = vmatpush1.msra.mxu0 %v626
      %1178 = vmatprep.subr.mxu0 %v624
      %1179 = vmatpush1.msra.mxu0 %v623
      %1180 = vmatprep.subr.mxu0 %v621
      %1181 = vmatpush1.msra.mxu0 %v620
      %1182 = vmatprep.subr.mxu0 %v618
      %1183 = vmatpush1.msra.mxu0 %v617
      %1184 = vmatprep.subr.mxu0 %v615
      %1185 = vmatpush1.msra.mxu0 %v614
      %1186 = vmatprep.subr.mxu0 %v612
      %1187 = vmatpush1.msra.mxu0 %v611
      %1188 = vmatprep.subr.mxu0 %v609
      %1189 = vmatpush1.msra.mxu0 %v608
      %1190 = vmatprep.subr.mxu0 %v606
      %1191 = vmatpush1.msra.mxu0 %v605
      %1192 = vmatprep.subr.mxu0 %v603
      %1193 = vmatpush1.msra.mxu0 %v602
      %1194 = vmatprep.subr.mxu0 %v600
      %1195 = vmatpush1.msra.mxu0 %v599
      %1196 = vmatprep.subr.mxu0 %v597
      %1197 = vmatpush1.msra.mxu0 %v596
      %1198 = vmatprep.subr.mxu0 %v594
      %1199 = vmatpush1.msra.mxu0 %v593
      %1200 = vmatprep.subr.mxu0 %v591
      %1201 = vmatpush1.msra.mxu0 %v590
      %1202 = vmatprep.subr.mxu0 0.0
      %1203 = vmatpush2.msra.mxu0 0.0
      %1204 = vmatprep.subr.mxu0 0.0
      %1205 = vmatpush2.msra.mxu0 0.0
      %1206 = vmatprep.subr.mxu0 0.0
      %1207 = vmatpush2.msra.mxu0 0.0
      %1208 = vmatprep.subr.mxu0 0.0
      %1209 = vmatpush2.msra.mxu0 0.0
      %1210 = vmatprep.subr.mxu0 0.0
      %1211 = vmatpush2.msra.mxu0 0.0
      %1212 = vmatprep.subr.mxu0 0.0
      %1213 = vmatpush2.msra.mxu0 0.0
      %1214 = vmatprep.subr.mxu0 0.0
      %1215 = vmatpush2.msra.mxu0 0.0
      %1216 = vmatprep.subr.mxu0 0.0
      %1217 = vmatpush2.msra.mxu0 0.0
      %1218 = vmatprep.subr.mxu0 0.0
      %1219 = vmatpush2.msra.mxu0 0.0
      %1220 = vmatprep.subr.mxu0 0.0
      %1221 = vmatpush2.msra.mxu0 0.0
      %1222 = vmatprep.subr.mxu0 0.0
      %1223 = vmatpush2.msra.mxu0 0.0
      %1224 = vmatprep.subr.mxu0 0.0
      %1225 = vmatpush2.msra.mxu0 0.0
      %1226 = vmatprep.subr.mxu0 0.0
      %1227 = vmatpush2.msra.mxu0 0.0
      %1228 = vmatprep.subr.mxu0 0.0
      %1229 = vmatpush2.msra.mxu0 0.0
      %1230 = vmatprep.subr.mxu0 0.0
      %1231 = vmatpush2.msra.mxu0 0.0
      %1232 = vmatprep.subr.mxu0 0.0
      %1233 = vmatpush2.msra.mxu0 0.0
      %1234 = vmatprep.mubr.f32.mxu0 0.0
      %1235 = vmatmul.mubr.f32.gmra.mxu0 %v1160
      %v1236 = vpop.f32.mrf.mxu0
      %v1237 = vadd.f32 0.0, %v1236
      %v1238 = vpop.f32.mrf.mxu0
      %v1239 = vadd.f32 0.0, %v1238
      %1240 = vdwg.mxu0
      %1241 = vmatprep.subr.mxu0 0.0
      %1242 = vmatpush1.msra.mxu0 %v637
      %1243 = vmatprep.subr.mxu0 0.0
      %1244 = vmatpush1.msra.mxu0 %v634
      %1245 = vmatprep.subr.mxu0 0.0
      %1246 = vmatpush1.msra.mxu0 %v631
      %1247 = vmatprep.subr.mxu0 0.0
      %1248 = vmatpush1.msra.mxu0 %v628
      %1249 = vmatprep.subr.mxu0 0.0
      %1250 = vmatpush1.msra.mxu0 %v625
      %1251 = vmatprep.subr.mxu0 0.0
      %1252 = vmatpush1.msra.mxu0 %v622
      %1253 = vmatprep.subr.mxu0 0.0
      %1254 = vmatpush1.msra.mxu0 %v619
      %1255 = vmatprep.subr.mxu0 0.0
      %1256 = vmatpush1.msra.mxu0 %v616
      %1257 = vmatprep.subr.mxu0 0.0
      %1258 = vmatpush1.msra.mxu0 %v613
      %1259 = vmatprep.subr.mxu0 0.0
      %1260 = vmatpush1.msra.mxu0 %v610
      %1261 = vmatprep.subr.mxu0 0.0
      %1262 = vmatpush1.msra.mxu0 %v607
      %1263 = vmatprep.subr.mxu0 0.0
      %1264 = vmatpush1.msra.mxu0 %v604
      %1265 = vmatprep.subr.mxu0 0.0
      %1266 = vmatpush1.msra.mxu0 %v601
      %1267 = vmatprep.subr.mxu0 0.0
      %1268 = vmatpush1.msra.mxu0 %v598
      %1269 = vmatprep.subr.mxu0 0.0
      %1270 = vmatpush1.msra.mxu0 %v595
      %1271 = vmatprep.subr.mxu0 0.0
      %1272 = vmatpush1.msra.mxu0 %v592
      %1273 = vmatprep.subr.mxu0 0.0
      %1274 = vmatpush2.msra.mxu0 0.0
      %1275 = vmatprep.subr.mxu0 0.0
      %1276 = vmatpush2.msra.mxu0 0.0
      %1277 = vmatprep.subr.mxu0 0.0
      %1278 = vmatpush2.msra.mxu0 0.0
      %1279 = vmatprep.subr.mxu0 0.0
      %1280 = vmatpush2.msra.mxu0 0.0
      %1281 = vmatprep.subr.mxu0 0.0
      %1282 = vmatpush2.msra.mxu0 0.0
      %1283 = vmatprep.subr.mxu0 0.0
      %1284 = vmatpush2.msra.mxu0 0.0
      %1285 = vmatprep.subr.mxu0 0.0
      %1286 = vmatpush2.msra.mxu0 0.0
      %1287 = vmatprep.subr.mxu0 0.0
      %1288 = vmatpush2.msra.mxu0 0.0
      %1289 = vmatprep.subr.mxu0 0.0
      %1290 = vmatpush2.msra.mxu0 0.0
      %1291 = vmatprep.subr.mxu0 0.0
      %1292 = vmatpush2.msra.mxu0 0.0
      %1293 = vmatprep.subr.mxu0 0.0
      %1294 = vmatpush2.msra.mxu0 0.0
      %1295 = vmatprep.subr.mxu0 0.0
      %1296 = vmatpush2.msra.mxu0 0.0
      %1297 = vmatprep.subr.mxu0 0.0
      %1298 = vmatpush2.msra.mxu0 0.0
      %1299 = vmatprep.subr.mxu0 0.0
      %1300 = vmatpush2.msra.mxu0 0.0
      %1301 = vmatprep.subr.mxu0 0.0
      %1302 = vmatpush2.msra.mxu0 0.0
      %1303 = vmatprep.subr.mxu0 0.0
      %1304 = vmatpush2.msra.mxu0 0.0
      %1305 = vmatprep.mubr.f32.mxu0 0.0
      %1306 = vmatmul.mubr.f32.gmra.mxu0 %v1160
      %v1307 = vpop.f32.mrf.mxu0
      %v1308 = vadd.f32 0.0, %v1307
      %v1309 = vpop.f32.mrf.mxu0
      %1310 = vdwg.mxu0
      %v1311 = vadd.f32 %v1167, %v1237
      %v1312 = vxor.u32 %v1311, 2147483648
      %v1313 = vmul.f32 %v1312, 1.442695
      %v1314 = vpow.pop %v1313
      %v1315 = vadd.f32 %v1314, 1.0
      %v1316 = vrcp.pop %v1315
      %v1317 = vmul.f32 1.0, %v1316
      %v1318 = vadd.f32 %v1168, %v1239
      %v1319 = vxor.u32 %v1318, 2147483648
      %v1320 = vmul.f32 %v1319, 1.442695
      %v1321 = vpow.pop %v1320
      %v1322 = vadd.f32 %v1321, 1.0
      %v1323 = vrcp.pop %v1322
      %v1324 = vmul.f32 1.0, %v1323
      %v1325 = vadd.f32 %v1308, %v643
      %v1326 = vmul.f32 %v1317, %v1325
      %v1327 = vadd.f32 %v1169, %v1326
      %v1328 = vtanh.pop %v1327
      %v1329 = vsub.f32 1.0, %v1324
      %v1330 = vmul.f32 %v1329, %v1328
      %v1331 = vmul.f32 %v1324, %v1160
      %v1332 = vadd.f32 %v1330, %v1331
      %s1333 = scalar_select %p274, 24, 32
      %s1334 = sshra.s32 %s1333, 3
      %s1335 = sand.u32 %s1333, 7
      %s1336 = smul.u32 %s1334, 3
      %s1337 = smul.addr %s1336, 8
      %s1338 = scalar_lea.vmem [#allocation2], %s1337
      %v1339 = vld [vmem:[%s1338] sm:$0xff]
      %v1340 = vld [vmem:[%s1338 + $0x8] sm:$0xff]
      %v1341 = vld [vmem:[%s1338 + $0x10] sm:$0xff]
      %1342 = vmatprep.subr.mxu0 %v636
      %1343 = vmatpush1.msra.mxu0 %v635
      %1344 = vmatprep.subr.mxu0 %v633
      %1345 = vmatpush1.msra.mxu0 %v632
      %1346 = vmatprep.subr.mxu0 %v630
      %1347 = vmatpush1.msra.mxu0 %v629
      %1348 = vmatprep.subr.mxu0 %v627
      %1349 = vmatpush1.msra.mxu0 %v626
      %1350 = vmatprep.subr.mxu0 %v624
      %1351 = vmatpush1.msra.mxu0 %v623
      %1352 = vmatprep.subr.mxu0 %v621
      %1353 = vmatpush1.msra.mxu0 %v620
      %1354 = vmatprep.subr.mxu0 %v618
      %1355 = vmatpush1.msra.mxu0 %v617
      %1356 = vmatprep.subr.mxu0 %v615
      %1357 = vmatpush1.msra.mxu0 %v614
      %1358 = vmatprep.subr.mxu0 %v612
      %1359 = vmatpush1.msra.mxu0 %v611
      %1360 = vmatprep.subr.mxu0 %v609
      %1361 = vmatpush1.msra.mxu0 %v608
      %1362 = vmatprep.subr.mxu0 %v606
      %1363 = vmatpush1.msra.mxu0 %v605
      %1364 = vmatprep.subr.mxu0 %v603
      %1365 = vmatpush1.msra.mxu0 %v602
      %1366 = vmatprep.subr.mxu0 %v600
      %1367 = vmatpush1.msra.mxu0 %v599
      %1368 = vmatprep.subr.mxu0 %v597
      %1369 = vmatpush1.msra.mxu0 %v596
      %1370 = vmatprep.subr.mxu0 %v594
      %1371 = vmatpush1.msra.mxu0 %v593
      %1372 = vmatprep.subr.mxu0 %v591
      %1373 = vmatpush1.msra.mxu0 %v590
      %1374 = vmatprep.subr.mxu0 0.0
      %1375 = vmatpush2.msra.mxu0 0.0
      %1376 = vmatprep.subr.mxu0 0.0
      %1377 = vmatpush2.msra.mxu0 0.0
      %1378 = vmatprep.subr.mxu0 0.0
      %1379 = vmatpush2.msra.mxu0 0.0
      %1380 = vmatprep.subr.mxu0 0.0
      %1381 = vmatpush2.msra.mxu0 0.0
      %1382 = vmatprep.subr.mxu0 0.0
      %1383 = vmatpush2.msra.mxu0 0.0
      %1384 = vmatprep.subr.mxu0 0.0
      %1385 = vmatpush2.msra.mxu0 0.0
      %1386 = vmatprep.subr.mxu0 0.0
      %1387 = vmatpush2.msra.mxu0 0.0
      %1388 = vmatprep.subr.mxu0 0.0
      %1389 = vmatpush2.msra.mxu0 0.0
      %1390 = vmatprep.subr.mxu0 0.0
      %1391 = vmatpush2.msra.mxu0 0.0
      %1392 = vmatprep.subr.mxu0 0.0
      %1393 = vmatpush2.msra.mxu0 0.0
      %1394 = vmatprep.subr.mxu0 0.0
      %1395 = vmatpush2.msra.mxu0 0.0
      %1396 = vmatprep.subr.mxu0 0.0
      %1397 = vmatpush2.msra.mxu0 0.0
      %1398 = vmatprep.subr.mxu0 0.0
      %1399 = vmatpush2.msra.mxu0 0.0
      %1400 = vmatprep.subr.mxu0 0.0
      %1401 = vmatpush2.msra.mxu0 0.0
      %1402 = vmatprep.subr.mxu0 0.0
      %1403 = vmatpush2.msra.mxu0 0.0
      %1404 = vmatprep.subr.mxu0 0.0
      %1405 = vmatpush2.msra.mxu0 0.0
      %1406 = vmatprep.mubr.f32.mxu0 0.0
      %1407 = vmatmul.mubr.f32.gmra.mxu0 %v1332
      %v1408 = vpop.f32.mrf.mxu0
      %v1409 = vadd.f32 0.0, %v1408
      %v1410 = vpop.f32.mrf.mxu0
      %v1411 = vadd.f32 0.0, %v1410
      %1412 = vdwg.mxu0
      %1413 = vmatprep.subr.mxu0 0.0
      %1414 = vmatpush1.msra.mxu0 %v637
      %1415 = vmatprep.subr.mxu0 0.0
      %1416 = vmatpush1.msra.mxu0 %v634
      %1417 = vmatprep.subr.mxu0 0.0
      %1418 = vmatpush1.msra.mxu0 %v631
      %1419 = vmatprep.subr.mxu0 0.0
      %1420 = vmatpush1.msra.mxu0 %v628
      %1421 = vmatprep.subr.mxu0 0.0
      %1422 = vmatpush1.msra.mxu0 %v625
      %1423 = vmatprep.subr.mxu0 0.0
      %1424 = vmatpush1.msra.mxu0 %v622
      %1425 = vmatprep.subr.mxu0 0.0
      %1426 = vmatpush1.msra.mxu0 %v619
      %1427 = vmatprep.subr.mxu0 0.0
      %1428 = vmatpush1.msra.mxu0 %v616
      %1429 = vmatprep.subr.mxu0 0.0
      %1430 = vmatpush1.msra.mxu0 %v613
      %1431 = vmatprep.subr.mxu0 0.0
      %1432 = vmatpush1.msra.mxu0 %v610
      %1433 = vmatprep.subr.mxu0 0.0
      %1434 = vmatpush1.msra.mxu0 %v607
      %1435 = vmatprep.subr.mxu0 0.0
      %1436 = vmatpush1.msra.mxu0 %v604
      %1437 = vmatprep.subr.mxu0 0.0
      %1438 = vmatpush1.msra.mxu0 %v601
      %1439 = vmatprep.subr.mxu0 0.0
      %1440 = vmatpush1.msra.mxu0 %v598
      %1441 = vmatprep.subr.mxu0 0.0
      %1442 = vmatpush1.msra.mxu0 %v595
      %1443 = vmatprep.subr.mxu0 0.0
      %1444 = vmatpush1.msra.mxu0 %v592
      %1445 = vmatprep.subr.mxu0 0.0
      %1446 = vmatpush2.msra.mxu0 0.0
      %1447 = vmatprep.subr.mxu0 0.0
      %1448 = vmatpush2.msra.mxu0 0.0
      %1449 = vmatprep.subr.mxu0 0.0
      %1450 = vmatpush2.msra.mxu0 0.0
      %1451 = vmatprep.subr.mxu0 0.0
      %1452 = vmatpush2.msra.mxu0 0.0
      %1453 = vmatprep.subr.mxu0 0.0
      %1454 = vmatpush2.msra.mxu0 0.0
      %1455 = vmatprep.subr.mxu0 0.0
      %1456 = vmatpush2.msra.mxu0 0.0
      %1457 = vmatprep.subr.mxu0 0.0
      %1458 = vmatpush2.msra.mxu0 0.0
      %1459 = vmatprep.subr.mxu0 0.0
      %1460 = vmatpush2.msra.mxu0 0.0
      %1461 = vmatprep.subr.mxu0 0.0
      %1462 = vmatpush2.msra.mxu0 0.0
      %1463 = vmatprep.subr.mxu0 0.0
      %1464 = vmatpush2.msra.mxu0 0.0
      %1465 = vmatprep.subr.mxu0 0.0
      %1466 = vmatpush2.msra.mxu0 0.0
      %1467 = vmatprep.subr.mxu0 0.0
      %1468 = vmatpush2.msra.mxu0 0.0
      %1469 = vmatprep.subr.mxu0 0.0
      %1470 = vmatpush2.msra.mxu0 0.0
      %1471 = vmatprep.subr.mxu0 0.0
      %1472 = vmatpush2.msra.mxu0 0.0
      %1473 = vmatprep.subr.mxu0 0.0
      %1474 = vmatpush2.msra.mxu0 0.0
      %1475 = vmatprep.subr.mxu0 0.0
      %1476 = vmatpush2.msra.mxu0 0.0
      %1477 = vmatprep.mubr.f32.mxu0 0.0
      %1478 = vmatmul.mubr.f32.gmra.mxu0 %v1332
      %v1479 = vpop.f32.mrf.mxu0
      %v1480 = vadd.f32 0.0, %v1479
      %v1481 = vpop.f32.mrf.mxu0
      %1482 = vdwg.mxu0
      %v1483 = vadd.f32 %v1339, %v1409
      %v1484 = vxor.u32 %v1483, 2147483648
      %v1485 = vmul.f32 %v1484, 1.442695
      %v1486 = vpow.pop %v1485
      %v1487 = vadd.f32 %v1486, 1.0
      %v1488 = vrcp.pop %v1487
      %v1489 = vmul.f32 1.0, %v1488
      %v1490 = vadd.f32 %v1340, %v1411
      %v1491 = vxor.u32 %v1490, 2147483648
      %v1492 = vmul.f32 %v1491, 1.442695
      %v1493 = vpow.pop %v1492
      %v1494 = vadd.f32 %v1493, 1.0
      %v1495 = vrcp.pop %v1494
      %v1496 = vmul.f32 1.0, %v1495
      %v1497 = vadd.f32 %v1480, %v643
      %v1498 = vmul.f32 %v1489, %v1497
      %v1499 = vadd.f32 %v1341, %v1498
      %v1500 = vtanh.pop %v1499
      %v1501 = vsub.f32 1.0, %v1496
      %v1502 = vmul.f32 %v1501, %v1500
      %v1503 = vmul.f32 %v1496, %v1332
      %v1504 = vadd.f32 %v1502, %v1503
      %s1505 = scalar_select %p274, 16, 40
      %s1506 = sshra.s32 %s1505, 3
      %s1507 = sand.u32 %s1505, 7
      %s1508 = smul.u32 %s1506, 3
      %s1509 = smul.addr %s1508, 8
      %s1510 = scalar_lea.vmem [#allocation2], %s1509
      %v1511 = vld [vmem:[%s1510] sm:$0xff]
      %v1512 = vld [vmem:[%s1510 + $0x8] sm:$0xff]
      %v1513 = vld [vmem:[%s1510 + $0x10] sm:$0xff]
      %1514 = vmatprep.subr.mxu0 %v636
      %1515 = vmatpush1.msra.mxu0 %v635
      %1516 = vmatprep.subr.mxu0 %v633
      %1517 = vmatpush1.msra.mxu0 %v632
      %1518 = vmatprep.subr.mxu0 %v630
      %1519 = vmatpush1.msra.mxu0 %v629
      %1520 = vmatprep.subr.mxu0 %v627
      %1521 = vmatpush1.msra.mxu0 %v626
      %1522 = vmatprep.subr.mxu0 %v624
      %1523 = vmatpush1.msra.mxu0 %v623
      %1524 = vmatprep.subr.mxu0 %v621
      %1525 = vmatpush1.msra.mxu0 %v620
      %1526 = vmatprep.subr.mxu0 %v618
      %1527 = vmatpush1.msra.mxu0 %v617
      %1528 = vmatprep.subr.mxu0 %v615
      %1529 = vmatpush1.msra.mxu0 %v614
      %1530 = vmatprep.subr.mxu0 %v612
      %1531 = vmatpush1.msra.mxu0 %v611
      %1532 = vmatprep.subr.mxu0 %v609
      %1533 = vmatpush1.msra.mxu0 %v608
      %1534 = vmatprep.subr.mxu0 %v606
      %1535 = vmatpush1.msra.mxu0 %v605
      %1536 = vmatprep.subr.mxu0 %v603
      %1537 = vmatpush1.msra.mxu0 %v602
      %1538 = vmatprep.subr.mxu0 %v600
      %1539 = vmatpush1.msra.mxu0 %v599
      %1540 = vmatprep.subr.mxu0 %v597
      %1541 = vmatpush1.msra.mxu0 %v596
      %1542 = vmatprep.subr.mxu0 %v594
      %1543 = vmatpush1.msra.mxu0 %v593
      %1544 = vmatprep.subr.mxu0 %v591
      %1545 = vmatpush1.msra.mxu0 %v590
      %1546 = vmatprep.subr.mxu0 0.0
      %1547 = vmatpush2.msra.mxu0 0.0
      %1548 = vmatprep.subr.mxu0 0.0
      %1549 = vmatpush2.msra.mxu0 0.0
      %1550 = vmatprep.subr.mxu0 0.0
      %1551 = vmatpush2.msra.mxu0 0.0
      %1552 = vmatprep.subr.mxu0 0.0
      %1553 = vmatpush2.msra.mxu0 0.0
      %1554 = vmatprep.subr.mxu0 0.0
      %1555 = vmatpush2.msra.mxu0 0.0
      %1556 = vmatprep.subr.mxu0 0.0
      %1557 = vmatpush2.msra.mxu0 0.0
      %1558 = vmatprep.subr.mxu0 0.0
      %1559 = vmatpush2.msra.mxu0 0.0
      %1560 = vmatprep.subr.mxu0 0.0
      %1561 = vmatpush2.msra.mxu0 0.0
      %1562 = vmatprep.subr.mxu0 0.0
      %1563 = vmatpush2.msra.mxu0 0.0
      %1564 = vmatprep.subr.mxu0 0.0
      %1565 = vmatpush2.msra.mxu0 0.0
      %1566 = vmatprep.subr.mxu0 0.0
      %1567 = vmatpush2.msra.mxu0 0.0
      %1568 = vmatprep.subr.mxu0 0.0
      %1569 = vmatpush2.msra.mxu0 0.0
      %1570 = vmatprep.subr.mxu0 0.0
      %1571 = vmatpush2.msra.mxu0 0.0
      %1572 = vmatprep.subr.mxu0 0.0
      %1573 = vmatpush2.msra.mxu0 0.0
      %1574 = vmatprep.subr.mxu0 0.0
      %1575 = vmatpush2.msra.mxu0 0.0
      %1576 = vmatprep.subr.mxu0 0.0
      %1577 = vmatpush2.msra.mxu0 0.0
      %1578 = vmatprep.mubr.f32.mxu0 0.0
      %1579 = vmatmul.mubr.f32.gmra.mxu0 %v1504
      %v1580 = vpop.f32.mrf.mxu0
      %v1581 = vadd.f32 0.0, %v1580
      %v1582 = vpop.f32.mrf.mxu0
      %v1583 = vadd.f32 0.0, %v1582
      %1584 = vdwg.mxu0
      %1585 = vmatprep.subr.mxu0 0.0
      %1586 = vmatpush1.msra.mxu0 %v637
      %1587 = vmatprep.subr.mxu0 0.0
      %1588 = vmatpush1.msra.mxu0 %v634
      %1589 = vmatprep.subr.mxu0 0.0
      %1590 = vmatpush1.msra.mxu0 %v631
      %1591 = vmatprep.subr.mxu0 0.0
      %1592 = vmatpush1.msra.mxu0 %v628
      %1593 = vmatprep.subr.mxu0 0.0
      %1594 = vmatpush1.msra.mxu0 %v625
      %1595 = vmatprep.subr.mxu0 0.0
      %1596 = vmatpush1.msra.mxu0 %v622
      %1597 = vmatprep.subr.mxu0 0.0
      %1598 = vmatpush1.msra.mxu0 %v619
      %1599 = vmatprep.subr.mxu0 0.0
      %1600 = vmatpush1.msra.mxu0 %v616
      %1601 = vmatprep.subr.mxu0 0.0
      %1602 = vmatpush1.msra.mxu0 %v613
      %1603 = vmatprep.subr.mxu0 0.0
      %1604 = vmatpush1.msra.mxu0 %v610
      %1605 = vmatprep.subr.mxu0 0.0
      %1606 = vmatpush1.msra.mxu0 %v607
      %1607 = vmatprep.subr.mxu0 0.0
      %1608 = vmatpush1.msra.mxu0 %v604
      %1609 = vmatprep.subr.mxu0 0.0
      %1610 = vmatpush1.msra.mxu0 %v601
      %1611 = vmatprep.subr.mxu0 0.0
      %1612 = vmatpush1.msra.mxu0 %v598
      %1613 = vmatprep.subr.mxu0 0.0
      %1614 = vmatpush1.msra.mxu0 %v595
      %1615 = vmatprep.subr.mxu0 0.0
      %1616 = vmatpush1.msra.mxu0 %v592
      %1617 = vmatprep.subr.mxu0 0.0
      %1618 = vmatpush2.msra.mxu0 0.0
      %1619 = vmatprep.subr.mxu0 0.0
      %1620 = vmatpush2.msra.mxu0 0.0
      %1621 = vmatprep.subr.mxu0 0.0
      %1622 = vmatpush2.msra.mxu0 0.0
      %1623 = vmatprep.subr.mxu0 0.0
      %1624 = vmatpush2.msra.mxu0 0.0
      %1625 = vmatprep.subr.mxu0 0.0
      %1626 = vmatpush2.msra.mxu0 0.0
      %1627 = vmatprep.subr.mxu0 0.0
      %1628 = vmatpush2.msra.mxu0 0.0
      %1629 = vmatprep.subr.mxu0 0.0
      %1630 = vmatpush2.msra.mxu0 0.0
      %1631 = vmatprep.subr.mxu0 0.0
      %1632 = vmatpush2.msra.mxu0 0.0
      %1633 = vmatprep.subr.mxu0 0.0
      %1634 = vmatpush2.msra.mxu0 0.0
      %1635 = vmatprep.subr.mxu0 0.0
      %1636 = vmatpush2.msra.mxu0 0.0
      %1637 = vmatprep.subr.mxu0 0.0
      %1638 = vmatpush2.msra.mxu0 0.0
      %1639 = vmatprep.subr.mxu0 0.0
      %1640 = vmatpush2.msra.mxu0 0.0
      %1641 = vmatprep.subr.mxu0 0.0
      %1642 = vmatpush2.msra.mxu0 0.0
      %1643 = vmatprep.subr.mxu0 0.0
      %1644 = vmatpush2.msra.mxu0 0.0
      %1645 = vmatprep.subr.mxu0 0.0
      %1646 = vmatpush2.msra.mxu0 0.0
      %1647 = vmatprep.subr.mxu0 0.0
      %1648 = vmatpush2.msra.mxu0 0.0
      %1649 = vmatprep.mubr.f32.mxu0 0.0
      %1650 = vmatmul.mubr.f32.gmra.mxu0 %v1504
      %v1651 = vpop.f32.mrf.mxu0
      %v1652 = vadd.f32 0.0, %v1651
      %v1653 = vpop.f32.mrf.mxu0
      %1654 = vdwg.mxu0
      %v1655 = vadd.f32 %v1511, %v1581
      %v1656 = vxor.u32 %v1655, 2147483648
      %v1657 = vmul.f32 %v1656, 1.442695
      %v1658 = vpow.pop %v1657
      %v1659 = vadd.f32 %v1658, 1.0
      %v1660 = vrcp.pop %v1659
      %v1661 = vmul.f32 1.0, %v1660
      %v1662 = vadd.f32 %v1512, %v1583
      %v1663 = vxor.u32 %v1662, 2147483648
      %v1664 = vmul.f32 %v1663, 1.442695
      %v1665 = vpow.pop %v1664
      %v1666 = vadd.f32 %v1665, 1.0
      %v1667 = vrcp.pop %v1666
      %v1668 = vmul.f32 1.0, %v1667
      %v1669 = vadd.f32 %v1652, %v643
      %v1670 = vmul.f32 %v1661, %v1669
      %v1671 = vadd.f32 %v1513, %v1670
      %v1672 = vtanh.pop %v1671
      %v1673 = vsub.f32 1.0, %v1668
      %v1674 = vmul.f32 %v1673, %v1672
      %v1675 = vmul.f32 %v1668, %v1504
      %v1676 = vadd.f32 %v1674, %v1675
      %s1677 = scalar_select %p274, 8, 48
      %s1678 = sshra.s32 %s1677, 3
      %s1679 = sand.u32 %s1677, 7
      %s1680 = smul.u32 %s1678, 3
      %s1681 = smul.addr %s1680, 8
      %s1682 = scalar_lea.vmem [#allocation2], %s1681
      %v1683 = vld [vmem:[%s1682] sm:$0xff]
      %v1684 = vld [vmem:[%s1682 + $0x8] sm:$0xff]
      %v1685 = vld [vmem:[%s1682 + $0x10] sm:$0xff]
      %1686 = vmatprep.subr.mxu0 %v636
      %1687 = vmatpush1.msra.mxu0 %v635
      %1688 = vmatprep.subr.mxu0 %v633
      %1689 = vmatpush1.msra.mxu0 %v632
      %1690 = vmatprep.subr.mxu0 %v630
      %1691 = vmatpush1.msra.mxu0 %v629
      %1692 = vmatprep.subr.mxu0 %v627
      %1693 = vmatpush1.msra.mxu0 %v626
      %1694 = vmatprep.subr.mxu0 %v624
      %1695 = vmatpush1.msra.mxu0 %v623
      %1696 = vmatprep.subr.mxu0 %v621
      %1697 = vmatpush1.msra.mxu0 %v620
      %1698 = vmatprep.subr.mxu0 %v618
      %1699 = vmatpush1.msra.mxu0 %v617
      %1700 = vmatprep.subr.mxu0 %v615
      %1701 = vmatpush1.msra.mxu0 %v614
      %1702 = vmatprep.subr.mxu0 %v612
      %1703 = vmatpush1.msra.mxu0 %v611
      %1704 = vmatprep.subr.mxu0 %v609
      %1705 = vmatpush1.msra.mxu0 %v608
      %1706 = vmatprep.subr.mxu0 %v606
      %1707 = vmatpush1.msra.mxu0 %v605
      %1708 = vmatprep.subr.mxu0 %v603
      %1709 = vmatpush1.msra.mxu0 %v602
      %1710 = vmatprep.subr.mxu0 %v600
      %1711 = vmatpush1.msra.mxu0 %v599
      %1712 = vmatprep.subr.mxu0 %v597
      %1713 = vmatpush1.msra.mxu0 %v596
      %1714 = vmatprep.subr.mxu0 %v594
      %1715 = vmatpush1.msra.mxu0 %v593
      %1716 = vmatprep.subr.mxu0 %v591
      %1717 = vmatpush1.msra.mxu0 %v590
      %1718 = vmatprep.subr.mxu0 0.0
      %1719 = vmatpush2.msra.mxu0 0.0
      %1720 = vmatprep.subr.mxu0 0.0
      %1721 = vmatpush2.msra.mxu0 0.0
      %1722 = vmatprep.subr.mxu0 0.0
      %1723 = vmatpush2.msra.mxu0 0.0
      %1724 = vmatprep.subr.mxu0 0.0
      %1725 = vmatpush2.msra.mxu0 0.0
      %1726 = vmatprep.subr.mxu0 0.0
      %1727 = vmatpush2.msra.mxu0 0.0
      %1728 = vmatprep.subr.mxu0 0.0
      %1729 = vmatpush2.msra.mxu0 0.0
      %1730 = vmatprep.subr.mxu0 0.0
      %1731 = vmatpush2.msra.mxu0 0.0
      %1732 = vmatprep.subr.mxu0 0.0
      %1733 = vmatpush2.msra.mxu0 0.0
      %1734 = vmatprep.subr.mxu0 0.0
      %1735 = vmatpush2.msra.mxu0 0.0
      %1736 = vmatprep.subr.mxu0 0.0
      %1737 = vmatpush2.msra.mxu0 0.0
      %1738 = vmatprep.subr.mxu0 0.0
      %1739 = vmatpush2.msra.mxu0 0.0
      %1740 = vmatprep.subr.mxu0 0.0
      %1741 = vmatpush2.msra.mxu0 0.0
      %1742 = vmatprep.subr.mxu0 0.0
      %1743 = vmatpush2.msra.mxu0 0.0
      %1744 = vmatprep.subr.mxu0 0.0
      %1745 = vmatpush2.msra.mxu0 0.0
      %1746 = vmatprep.subr.mxu0 0.0
      %1747 = vmatpush2.msra.mxu0 0.0
      %1748 = vmatprep.subr.mxu0 0.0
      %1749 = vmatpush2.msra.mxu0 0.0
      %1750 = vmatprep.mubr.f32.mxu0 0.0
      %1751 = vmatmul.mubr.f32.gmra.mxu0 %v1676
      %v1752 = vpop.f32.mrf.mxu0
      %v1753 = vadd.f32 0.0, %v1752
      %v1754 = vpop.f32.mrf.mxu0
      %v1755 = vadd.f32 0.0, %v1754
      %1756 = vdwg.mxu0
      %1757 = vmatprep.subr.mxu0 0.0
      %1758 = vmatpush1.msra.mxu0 %v637
      %1759 = vmatprep.subr.mxu0 0.0
      %1760 = vmatpush1.msra.mxu0 %v634
      %1761 = vmatprep.subr.mxu0 0.0
      %1762 = vmatpush1.msra.mxu0 %v631
      %1763 = vmatprep.subr.mxu0 0.0
      %1764 = vmatpush1.msra.mxu0 %v628
      %1765 = vmatprep.subr.mxu0 0.0
      %1766 = vmatpush1.msra.mxu0 %v625
      %1767 = vmatprep.subr.mxu0 0.0
      %1768 = vmatpush1.msra.mxu0 %v622
      %1769 = vmatprep.subr.mxu0 0.0
      %1770 = vmatpush1.msra.mxu0 %v619
      %1771 = vmatprep.subr.mxu0 0.0
      %1772 = vmatpush1.msra.mxu0 %v616
      %1773 = vmatprep.subr.mxu0 0.0
      %1774 = vmatpush1.msra.mxu0 %v613
      %1775 = vmatprep.subr.mxu0 0.0
      %1776 = vmatpush1.msra.mxu0 %v610
      %1777 = vmatprep.subr.mxu0 0.0
      %1778 = vmatpush1.msra.mxu0 %v607
      %1779 = vmatprep.subr.mxu0 0.0
      %1780 = vmatpush1.msra.mxu0 %v604
      %1781 = vmatprep.subr.mxu0 0.0
      %1782 = vmatpush1.msra.mxu0 %v601
      %1783 = vmatprep.subr.mxu0 0.0
      %1784 = vmatpush1.msra.mxu0 %v598
      %1785 = vmatprep.subr.mxu0 0.0
      %1786 = vmatpush1.msra.mxu0 %v595
      %1787 = vmatprep.subr.mxu0 0.0
      %1788 = vmatpush1.msra.mxu0 %v592
      %1789 = vmatprep.subr.mxu0 0.0
      %1790 = vmatpush2.msra.mxu0 0.0
      %1791 = vmatprep.subr.mxu0 0.0
      %1792 = vmatpush2.msra.mxu0 0.0
      %1793 = vmatprep.subr.mxu0 0.0
      %1794 = vmatpush2.msra.mxu0 0.0
      %1795 = vmatprep.subr.mxu0 0.0
      %1796 = vmatpush2.msra.mxu0 0.0
      %1797 = vmatprep.subr.mxu0 0.0
      %1798 = vmatpush2.msra.mxu0 0.0
      %1799 = vmatprep.subr.mxu0 0.0
      %1800 = vmatpush2.msra.mxu0 0.0
      %1801 = vmatprep.subr.mxu0 0.0
      %1802 = vmatpush2.msra.mxu0 0.0
      %1803 = vmatprep.subr.mxu0 0.0
      %1804 = vmatpush2.msra.mxu0 0.0
      %1805 = vmatprep.subr.mxu0 0.0
      %1806 = vmatpush2.msra.mxu0 0.0
      %1807 = vmatprep.subr.mxu0 0.0
      %1808 = vmatpush2.msra.mxu0 0.0
      %1809 = vmatprep.subr.mxu0 0.0
      %1810 = vmatpush2.msra.mxu0 0.0
      %1811 = vmatprep.subr.mxu0 0.0
      %1812 = vmatpush2.msra.mxu0 0.0
      %1813 = vmatprep.subr.mxu0 0.0
      %1814 = vmatpush2.msra.mxu0 0.0
      %1815 = vmatprep.subr.mxu0 0.0
      %1816 = vmatpush2.msra.mxu0 0.0
      %1817 = vmatprep.subr.mxu0 0.0
      %1818 = vmatpush2.msra.mxu0 0.0
      %1819 = vmatprep.subr.mxu0 0.0
      %1820 = vmatpush2.msra.mxu0 0.0
      %1821 = vmatprep.mubr.f32.mxu0 0.0
      %1822 = vmatmul.mubr.f32.gmra.mxu0 %v1676
      %v1823 = vpop.f32.mrf.mxu0
      %v1824 = vadd.f32 0.0, %v1823
      %v1825 = vpop.f32.mrf.mxu0
      %1826 = vdwg.mxu0
      %v1827 = vadd.f32 %v1683, %v1753
      %v1828 = vxor.u32 %v1827, 2147483648
      %v1829 = vmul.f32 %v1828, 1.442695
      %v1830 = vpow.pop %v1829
      %v1831 = vadd.f32 %v1830, 1.0
      %v1832 = vrcp.pop %v1831
      %v1833 = vmul.f32 1.0, %v1832
      %v1834 = vadd.f32 %v1684, %v1755
      %v1835 = vxor.u32 %v1834, 2147483648
      %v1836 = vmul.f32 %v1835, 1.442695
      %v1837 = vpow.pop %v1836
      %v1838 = vadd.f32 %v1837, 1.0
      %v1839 = vrcp.pop %v1838
      %v1840 = vmul.f32 1.0, %v1839
      %v1841 = vadd.f32 %v1824, %v643
      %v1842 = vmul.f32 %v1833, %v1841
      %v1843 = vadd.f32 %v1685, %v1842
      %v1844 = vtanh.pop %v1843
      %v1845 = vsub.f32 1.0, %v1840
      %v1846 = vmul.f32 %v1845, %v1844
      %v1847 = vmul.f32 %v1840, %v1676
      %v1848 = vadd.f32 %v1846, %v1847
      %s1849 = scalar_select %p274, 0, 56
      %s1850 = sshra.s32 %s1849, 3
      %s1851 = sand.u32 %s1849, 7
      %s1852 = smul.u32 %s1850, 3
      %s1853 = smul.addr %s1852, 8
      %s1854 = scalar_lea.vmem [#allocation2], %s1853
      %v1855 = vld [vmem:[%s1854] sm:$0xff]
      %v1856 = vld [vmem:[%s1854 + $0x8] sm:$0xff]
      %v1857 = vld [vmem:[%s1854 + $0x10] sm:$0xff]
      %1858 = vmatprep.subr.mxu0 %v636
      %1859 = vmatpush1.msra.mxu0 %v635
      %1860 = vmatprep.subr.mxu0 %v633
      %1861 = vmatpush1.msra.mxu0 %v632
      %1862 = vmatprep.subr.mxu0 %v630
      %1863 = vmatpush1.msra.mxu0 %v629
      %1864 = vmatprep.subr.mxu0 %v627
      %1865 = vmatpush1.msra.mxu0 %v626
      %1866 = vmatprep.subr.mxu0 %v624
      %1867 = vmatpush1.msra.mxu0 %v623
      %1868 = vmatprep.subr.mxu0 %v621
      %1869 = vmatpush1.msra.mxu0 %v620
      %1870 = vmatprep.subr.mxu0 %v618
      %1871 = vmatpush1.msra.mxu0 %v617
      %1872 = vmatprep.subr.mxu0 %v615
      %1873 = vmatpush1.msra.mxu0 %v614
      %1874 = vmatprep.subr.mxu0 %v612
      %1875 = vmatpush1.msra.mxu0 %v611
      %1876 = vmatprep.subr.mxu0 %v609
      %1877 = vmatpush1.msra.mxu0 %v608
      %1878 = vmatprep.subr.mxu0 %v606
      %1879 = vmatpush1.msra.mxu0 %v605
      %1880 = vmatprep.subr.mxu0 %v603
      %1881 = vmatpush1.msra.mxu0 %v602
      %1882 = vmatprep.subr.mxu0 %v600
      %1883 = vmatpush1.msra.mxu0 %v599
      %1884 = vmatprep.subr.mxu0 %v597
      %1885 = vmatpush1.msra.mxu0 %v596
      %1886 = vmatprep.subr.mxu0 %v594
      %1887 = vmatpush1.msra.mxu0 %v593
      %1888 = vmatprep.subr.mxu0 %v591
      %1889 = vmatpush1.msra.mxu0 %v590
      %1890 = vmatprep.subr.mxu0 0.0
      %1891 = vmatpush2.msra.mxu0 0.0
      %1892 = vmatprep.subr.mxu0 0.0
      %1893 = vmatpush2.msra.mxu0 0.0
      %1894 = vmatprep.subr.mxu0 0.0
      %1895 = vmatpush2.msra.mxu0 0.0
      %1896 = vmatprep.subr.mxu0 0.0
      %1897 = vmatpush2.msra.mxu0 0.0
      %1898 = vmatprep.subr.mxu0 0.0
      %1899 = vmatpush2.msra.mxu0 0.0
      %1900 = vmatprep.subr.mxu0 0.0
      %1901 = vmatpush2.msra.mxu0 0.0
      %1902 = vmatprep.subr.mxu0 0.0
      %1903 = vmatpush2.msra.mxu0 0.0
      %1904 = vmatprep.subr.mxu0 0.0
      %1905 = vmatpush2.msra.mxu0 0.0
      %1906 = vmatprep.subr.mxu0 0.0
      %1907 = vmatpush2.msra.mxu0 0.0
      %1908 = vmatprep.subr.mxu0 0.0
      %1909 = vmatpush2.msra.mxu0 0.0
      %1910 = vmatprep.subr.mxu0 0.0
      %1911 = vmatpush2.msra.mxu0 0.0
      %1912 = vmatprep.subr.mxu0 0.0
      %1913 = vmatpush2.msra.mxu0 0.0
      %1914 = vmatprep.subr.mxu0 0.0
      %1915 = vmatpush2.msra.mxu0 0.0
      %1916 = vmatprep.subr.mxu0 0.0
      %1917 = vmatpush2.msra.mxu0 0.0
      %1918 = vmatprep.subr.mxu0 0.0
      %1919 = vmatpush2.msra.mxu0 0.0
      %1920 = vmatprep.subr.mxu0 0.0
      %1921 = vmatpush2.msra.mxu0 0.0
      %1922 = vmatprep.mubr.f32.mxu0 0.0
      %1923 = vmatmul.mubr.f32.gmra.mxu0 %v1848
      %v1924 = vpop.f32.mrf.mxu0
      %v1925 = vadd.f32 0.0, %v1924
      %v1926 = vpop.f32.mrf.mxu0
      %v1927 = vadd.f32 0.0, %v1926
      %1928 = vdwg.mxu0
      %1929 = vmatprep.subr.mxu0 0.0
      %1930 = vmatpush1.msra.mxu0 %v637
      %1931 = vmatprep.subr.mxu0 0.0
      %1932 = vmatpush1.msra.mxu0 %v634
      %1933 = vmatprep.subr.mxu0 0.0
      %1934 = vmatpush1.msra.mxu0 %v631
      %1935 = vmatprep.subr.mxu0 0.0
      %1936 = vmatpush1.msra.mxu0 %v628
      %1937 = vmatprep.subr.mxu0 0.0
      %1938 = vmatpush1.msra.mxu0 %v625
      %1939 = vmatprep.subr.mxu0 0.0
      %1940 = vmatpush1.msra.mxu0 %v622
      %1941 = vmatprep.subr.mxu0 0.0
      %1942 = vmatpush1.msra.mxu0 %v619
      %1943 = vmatprep.subr.mxu0 0.0
      %1944 = vmatpush1.msra.mxu0 %v616
      %1945 = vmatprep.subr.mxu0 0.0
      %1946 = vmatpush1.msra.mxu0 %v613
      %1947 = vmatprep.subr.mxu0 0.0
      %1948 = vmatpush1.msra.mxu0 %v610
      %1949 = vmatprep.subr.mxu0 0.0
      %1950 = vmatpush1.msra.mxu0 %v607
      %1951 = vmatprep.subr.mxu0 0.0
      %1952 = vmatpush1.msra.mxu0 %v604
      %1953 = vmatprep.subr.mxu0 0.0
      %1954 = vmatpush1.msra.mxu0 %v601
      %1955 = vmatprep.subr.mxu0 0.0
      %1956 = vmatpush1.msra.mxu0 %v598
      %1957 = vmatprep.subr.mxu0 0.0
      %1958 = vmatpush1.msra.mxu0 %v595
      %1959 = vmatprep.subr.mxu0 0.0
      %1960 = vmatpush1.msra.mxu0 %v592
      %1961 = vmatprep.subr.mxu0 0.0
      %1962 = vmatpush2.msra.mxu0 0.0
      %1963 = vmatprep.subr.mxu0 0.0
      %1964 = vmatpush2.msra.mxu0 0.0
      %1965 = vmatprep.subr.mxu0 0.0
      %1966 = vmatpush2.msra.mxu0 0.0
      %1967 = vmatprep.subr.mxu0 0.0
      %1968 = vmatpush2.msra.mxu0 0.0
      %1969 = vmatprep.subr.mxu0 0.0
      %1970 = vmatpush2.msra.mxu0 0.0
      %1971 = vmatprep.subr.mxu0 0.0
      %1972 = vmatpush2.msra.mxu0 0.0
      %1973 = vmatprep.subr.mxu0 0.0
      %1974 = vmatpush2.msra.mxu0 0.0
      %1975 = vmatprep.subr.mxu0 0.0
      %1976 = vmatpush2.msra.mxu0 0.0
      %1977 = vmatprep.subr.mxu0 0.0
      %1978 = vmatpush2.msra.mxu0 0.0
      %1979 = vmatprep.subr.mxu0 0.0
      %1980 = vmatpush2.msra.mxu0 0.0
      %1981 = vmatprep.subr.mxu0 0.0
      %1982 = vmatpush2.msra.mxu0 0.0
      %1983 = vmatprep.subr.mxu0 0.0
      %1984 = vmatpush2.msra.mxu0 0.0
      %1985 = vmatprep.subr.mxu0 0.0
      %1986 = vmatpush2.msra.mxu0 0.0
      %1987 = vmatprep.subr.mxu0 0.0
      %1988 = vmatpush2.msra.mxu0 0.0
      %1989 = vmatprep.subr.mxu0 0.0
      %1990 = vmatpush2.msra.mxu0 0.0
      %1991 = vmatprep.subr.mxu0 0.0
      %1992 = vmatpush2.msra.mxu0 0.0
      %1993 = vmatprep.mubr.f32.mxu0 0.0
      %1994 = vmatmul.mubr.f32.gmra.mxu0 %v1848
      %v1995 = vpop.f32.mrf.mxu0
      %v1996 = vadd.f32 0.0, %v1995
      %v1997 = vpop.f32.mrf.mxu0
      %1998 = vdwg.mxu0
      %v1999 = vadd.f32 %v1855, %v1925
      %v2000 = vxor.u32 %v1999, 2147483648
      %v2001 = vmul.f32 %v2000, 1.442695
      %v2002 = vpow.pop %v2001
      %v2003 = vadd.f32 %v2002, 1.0
      %v2004 = vrcp.pop %v2003
      %v2005 = vmul.f32 1.0, %v2004
      %v2006 = vadd.f32 %v1856, %v1927
      %v2007 = vxor.u32 %v2006, 2147483648
      %v2008 = vmul.f32 %v2007, 1.442695
      %v2009 = vpow.pop %v2008
      %v2010 = vadd.f32 %v2009, 1.0
      %v2011 = vrcp.pop %v2010
      %v2012 = vmul.f32 1.0, %v2011
      %v2013 = vadd.f32 %v1996, %v643
      %v2014 = vmul.f32 %v2005, %v2013
      %v2015 = vadd.f32 %v1857, %v2014
      %v2016 = vtanh.pop %v2015
      %v2017 = vsub.f32 1.0, %v2012
      %v2018 = vmul.f32 %v2017, %v2016
      %v2019 = vmul.f32 %v2012, %v1848
      %v2020 = vadd.f32 %v2018, %v2019
      %2021 = vst [vmem:[%s273] sm:$0xff] %v2020
      %p2022 = scmp.lt.s32.totalorder %s16, 1
      %s2023 = scalar_select %p2022, %s16, 1
      %s2024 = smul.addr %s2023, 8
      %s2025 = scalar_lea.vmem %s5, %s2024
      // Predicated region
      $region41: #{winning_party_classifier.1} parent=39 // pred_check
        %p2026 = pneg %p159
      $region42: #{winning_party_classifier.1} parent=39 // pred_check_branch
        %2028 = sbr.rel (%p2026) target = $region44
      $region43: #{winning_party_classifier.1} parent=39 // pred_region
        _
      $region44: #{winning_party_classifier.1} parent=39 // pred_fallthru
        _
    $region40: #{winning_party_classifier.1} parent=5 // pred_fallthru
      _
    %p2029 = scmp.le.s32.totalorder 2, %s11
    // Predicated region
    $region45: #{winning_party_classifier.1} parent=5 // pred_check
      %p2030 = pneg %p2029
    $region46: #{winning_party_classifier.1} parent=5 // pred_check_branch
      %2032 = sbr.rel (%p2030) target = $region48
    $region47: #{winning_party_classifier.1} parent=5 // pred_region
      %s2033 = ssub.s32 %s11, 2
      // Predicated region
      $region49: #{winning_party_classifier.1} parent=47 // pred_check
        %p2034 = pneg %p165
      $region50: #{winning_party_classifier.1} parent=47 // pred_check_branch
        %2036 = sbr.rel (%p2034) target = $region52
      $region51: #{winning_party_classifier.1} parent=47 // pred_region
        %p2037 = scmp.lt.s32.totalorder %s17, 1
        %s2038 = scalar_select %p2037, %s17, 1
        %s2039 = smul.addr %s2038, 8
        %s2040 = scalar_lea.vmem %s5, %s2039
      $region52: #{winning_party_classifier.1} parent=47 // pred_fallthru
        _
    $region48: #{winning_party_classifier.1} parent=5 // pred_fallthru
      _
  $region6: #{winning_party_classifier.1} parent=0 // loop_footer
    %s15 = sadd.s32 1, %s11
  $region7: #{winning_party_classifier.1} parent=0 // loop_footer_branch
    %10 = sbr.rel target = $region3
  $region8: #{winning_party_classifier.1} parent=0 // loop_exit
    _

</llo_original>
